<compile_context>
chip_gen: v7x
topology: tpu7x:2x2x1
jax: 0.10.0
libtpu: 0.0.40
codegen_flags: <defaults>
</compile_context>

<pallas_src>
import functools

import jax
import jax.numpy as jnp
from jax.experimental import pallas as pl
from jax.experimental.pallas import tpu as pltpu


def _round_up(x, m):
    return ((x + m - 1) // m) * m


# ---------------------------------------------------------------------------
# Phase 1: conv as 16 shifted channel-major MXU matmuls + per-tile BN partials
# ---------------------------------------------------------------------------
def _conv_stats_kernel(x8_ref, w_ref, y_ref, sum_ref, css_ref, *, n_rows, ow):
    # x8_ref : (8, Cin, SR) bf16   parity/shift components, SR = (BH+1)*OW
    # w_ref  : (16, Cout, Cin) bf16, w_ref[i*4+j] = weight[:, :, i, j]  (resident)
    # y_ref  : (Cout, R) bf16      pre-BN conv output tile, channel-major
    # sum_ref/css_ref : (Cout, 1) f32  per-tile sum / centered sum of squares
    acc = None
    for p in (0, 1):
        for q in (0, 1):
            for b in (0, 1):
                comp = x8_ref[p * 4 + q * 2 + b]                    # (Cin, SR)
                for a in (0, 1):
                    lhs = comp[:, a * ow:a * ow + n_rows]           # (Cin, R)
                    k = (2 * a + p) * 4 + (2 * b + q)
                    part = jnp.dot(w_ref[k], lhs,
                                   preferred_element_type=jnp.float32)
                    acc = part if acc is None else acc + part
    y_ref[...] = acc.astype(y_ref.dtype)
    s = jnp.sum(acc, axis=1, keepdims=True)                         # (Cout, 1)
    mu = s * (1.0 / n_rows)
    css = jnp.sum((acc - mu) * (acc - mu), axis=1, keepdims=True)   # centered
    sum_ref[...] = s
    css_ref[...] = css


# ---------------------------------------------------------------------------
# Phase 2: fused BatchNorm affine (precomputed scale/shift) + LeakyReLU, NCHW out
# ---------------------------------------------------------------------------
def _bn_lrelu_kernel(y_ref, scale_ref, shift_ref, o_ref, *, negative_slope):
    # y_ref (Cout, R) bf16; scale/shift (Cout, 1) f32 resident; o_ref (Cout, R) f32.
    z = y_ref[...].astype(jnp.float32) * scale_ref[...] + shift_ref[...]
    o_ref[...] = jnp.where(z > 0, z, negative_slope * z)


# ---------------------------------------------------------------------------
# Wrapper glue
# ---------------------------------------------------------------------------
def _vmem_limit_bytes():
    cap = None
    try:
        cap = int(pltpu.get_tpu_info().vmem_capacity_bytes)
    except Exception:
        cap = None
    if not cap or cap <= 0:
        cap = 64 * 1024 * 1024
    return min((cap * 3) // 4, 96 * 1024 * 1024)


def _phase1_vmem_bytes(bh, ow, cin, cout):
    sr = (bh + 1) * ow
    r = bh * ow
    sub16 = lambda c: _round_up(max(c, 1), 16)
    lane = lambda l: _round_up(max(l, 1), 128)
    x8 = 8 * sub16(cin) * lane(sr) * 2 * 2          # double-buffered bf16 components
    w = 16 * sub16(cout) * lane(cin) * 2 * 2        # (conservatively double-buffered)
    y = sub16(cout) * lane(r) * 2 * 2               # bf16 out tile
    acc = _round_up(max(cout, 1), 8) * lane(r) * 4 * 2
    stats = 2 * _round_up(max(cout, 1), 8) * 128 * 4 * 2
    return x8 + w + y + acc + stats


def _pick_block_h(oh, ow, cin, cout, budget):
    divs = [d for d in range(1, oh + 1) if oh % d == 0]
    # n_blocks > 1 requires the per-block spatial extent to be lane-dense (%128).
    cands = [d for d in divs if d == oh or (d * ow) % 128 == 0]
    fitting = [d for d in cands if _phase1_vmem_bytes(d, ow, cin, cout) <= budget]
    return max(fitting) if fitting else min(cands)


def _build_shift_components(x_pad, oh, ow, bh, n_blocks):
    """x_pad: (N, Cin, H+2, W+2).  Returns (N*n_blocks, 8, Cin, (BH+1)*OW)."""
    n, cin = x_pad.shape[0], x_pad.shape[1]
    comps = []
    for p in (0, 1):
        for q in (0, 1):
            for b in (0, 1):
                par = x_pad[:, :, p::2, q::2]            # (N, Cin, OH+1, OW+1)
                c = par[:, :, :, b:b + ow]                # (N, Cin, OH+1, OW)
                if n_blocks == 1:
                    s = c.reshape(n, cin, (oh + 1) * ow)
                else:
                    rows = (jnp.arange(n_blocks)[:, None] * bh
                            + jnp.arange(bh + 1)[None, :])          # (n_blocks, BH+1)
                    s = c[:, :, rows, :]                  # (N, Cin, n_blocks, BH+1, OW)
                    s = jnp.moveaxis(s, 2, 1)             # (N, n_blocks, Cin, BH+1, OW)
                    s = s.reshape(n * n_blocks, cin, (bh + 1) * ow)
                comps.append(s)
    return jnp.stack(comps, axis=1)                       # (NB, 8, Cin, SR)


def cbr2d_forward(x, weight, gamma, beta, *, kernel_size=4, stride=2, padding=1,
                  eps=1e-5, negative_slope=0.2, block_h=None):
    """x: (N, Cin, H, W) f32. weight: (Cout, Cin, 4, 4). Returns (N, Cout, OH, OW) f32."""
    assert kernel_size == 4 and stride == 2 and padding == 1, "CBR2d default geometry only"
    N, Cin, H, W = x.shape
    Cout = weight.shape[0]
    assert weight.shape == (Cout, Cin, 4, 4)
    assert H % 2 == 0 and W % 2 == 0, "even spatial dims expected (pix2pix encoder)"
    OH, OW = H // 2, W // 2
    Mimg = OH * OW
    M = N * Mimg

    vmem_limit = _vmem_limit_bytes()
    budget = (vmem_limit * 2) // 3
    BH = block_h if block_h is not None else _pick_block_h(OH, OW, Cin, Cout, budget)
    assert OH % BH == 0
    n_blocks = OH // BH
    R = BH * OW
    SR = (BH + 1) * OW
    NB = N * n_blocks
    assert n_blocks == 1 or R % 128 == 0, "per-block spatial extent must be %128"

    # --- build the 8 parity/shift components (bf16) and the weight stack --------
    x_pad = jnp.pad(x, ((0, 0), (0, 0), (1, 1), (1, 1)))
    x8 = _build_shift_components(x_pad, OH, OW, BH, n_blocks).astype(jnp.bfloat16)
    w_stack = jnp.transpose(weight, (2, 3, 0, 1)).reshape(16, Cout, Cin).astype(jnp.bfloat16)

    # Cheap insurance: keep the contraction dim a multiple of 8 sublanes.
    Cin_p = max(_round_up(Cin, 8), 8)
    if Cin_p != Cin:
        x8 = jnp.pad(x8, ((0, 0), (0, 0), (0, Cin_p - Cin), (0, 0)))
        w_stack = jnp.pad(w_stack, ((0, 0), (0, 0), (0, Cin_p - Cin)))

    cparams = pltpu.CompilerParams(
        dimension_semantics=("parallel", "parallel"),
        vmem_limit_bytes=vmem_limit,
    )

    flops = 2 * 16 * Cin * Cout * M
    bytes_accessed = (int(x8.size) * 2 + int(w_stack.size) * 2
                      + N * Cout * Mimg * 2 + 2 * NB * Cout * 4)

    # ---- phase 1: conv matmuls + per-tile BN partial stats ---------------------
    kern1 = functools.partial(_conv_stats_kernel, n_rows=R, ow=OW)
    y, tsum, tcss = pl.pallas_call(
        kern1,
        out_shape=(
            jax.ShapeDtypeStruct((N, Cout, Mimg), jnp.bfloat16),
            jax.ShapeDtypeStruct((NB, Cout, 1), jnp.float32),
            jax.ShapeDtypeStruct((NB, Cout, 1), jnp.float32),
        ),
        grid_spec=pltpu.PrefetchScalarGridSpec(
            num_scalar_prefetch=0,
            grid=(N, n_blocks),
            in_specs=[
                pl.BlockSpec((None, 8, Cin_p, SR),
                             lambda n, t: (n * n_blocks + t, 0, 0, 0)),
                pl.BlockSpec((16, Cout, Cin_p), lambda n, t: (0, 0, 0)),  # resident
            ],
            out_specs=(
                pl.BlockSpec((None, Cout, R), lambda n, t: (n, 0, t)),
                pl.BlockSpec((None, Cout, 1), lambda n, t: (n * n_blocks + t, 0, 0)),
                pl.BlockSpec((None, Cout, 1), lambda n, t: (n * n_blocks + t, 0, 0)),
            ),
        ),
        compiler_params=cparams,
        cost_estimate=pl.CostEstimate(flops=flops, transcendentals=0,
                                      bytes_accessed=bytes_accessed),
    )(x8, w_stack)

    # ---- tiny wrapper-side merge of per-tile stats (parallel-variance formula) --
    tile_mean = tsum / float(R)                                   # (NB, Cout, 1)
    mean = jnp.sum(tsum, axis=0) / float(M)                       # (Cout, 1)
    var = (jnp.sum(tcss, axis=0)
           + float(R) * jnp.sum((tile_mean - mean) ** 2, axis=0)) / float(M)
    inv = jax.lax.rsqrt(var + eps)
    scale = gamma.reshape(Cout, 1).astype(jnp.float32) * inv       # (Cout, 1)
    shift = beta.reshape(Cout, 1).astype(jnp.float32) - mean * scale

    # ---- phase 2: normalize + LeakyReLU, written directly in NCHW layout --------
    kern2 = functools.partial(_bn_lrelu_kernel, negative_slope=negative_slope)
    out_flat = pl.pallas_call(
        kern2,
        out_shape=jax.ShapeDtypeStruct((N, Cout, Mimg), jnp.float32),
        grid_spec=pltpu.PrefetchScalarGridSpec(
            num_scalar_prefetch=0,
            grid=(N, n_blocks),
            in_specs=[
                pl.BlockSpec((None, Cout, R), lambda n, t: (n, 0, t)),
                pl.BlockSpec((Cout, 1), lambda n, t: (0, 0)),      # resident
                pl.BlockSpec((Cout, 1), lambda n, t: (0, 0)),      # resident
            ],
            out_specs=pl.BlockSpec((None, Cout, R), lambda n, t: (n, 0, t)),
        ),
        compiler_params=cparams,
    )(y, scale, shift)

    # Free reshape (no transpose): output is already NCHW-flat.
    return out_flat.reshape(N, Cout, OH, OW)


# ---------------------------------------------------------------------------
# Pure-JAX reference for correctness check
# ---------------------------------------------------------------------------
def cbr2d_reference(x, weight, gamma, beta, *, stride=2, padding=1,
                    eps=1e-5, negative_slope=0.2):
    y = jax.lax.conv_general_dilated(
        x, weight, window_strides=(stride, stride),
        padding=((padding, padding), (padding, padding)),
        dimension_numbers=("NCHW", "OIHW", "NCHW"))
    mean = jnp.mean(y, axis=(0, 2, 3), keepdims=True)
    var = jnp.mean((y - mean) ** 2, axis=(0, 2, 3), keepdims=True)
    y_hat = (y - mean) * jax.lax.rsqrt(var + eps)
    z = gamma.reshape(1, -1, 1, 1) * y_hat + beta.reshape(1, -1, 1, 1)
    return jnp.where(z > 0, z, negative_slope * z)


if __name__ == "__main__":
    key = jax.random.PRNGKey(0)
    k_x, k_w, k_x2 = jax.random.split(key, 3)

    N, Cin, H, W = 2, 4, 16, 16
    Cout, KH, KW = 8, 4, 4

    x = jax.random.normal(k_x, (N, Cin, H, W), dtype=jnp.float32)
    fan_in = Cin * KH * KW
    weight = jax.random.normal(k_w, (Cout, Cin, KH, KW), dtype=jnp.float32) / jnp.sqrt(fan_in)
    gamma = jnp.ones((Cout,), dtype=jnp.float32)   # BatchNorm2d default init
    beta = jnp.zeros((Cout,), dtype=jnp.float32)

    # MXU inputs are bf16 (f32 accumulation); compare against an f32 reference on
    # the same bf16-rounded inputs.  The inter-phase y is stored bf16, so allow
    # ~2^-9 relative storage error on top of that.
    x_q = x.astype(jnp.bfloat16).astype(jnp.float32)
    w_q = weight.astype(jnp.bfloat16).astype(jnp.float32)

    out = jax.block_until_ready(cbr2d_forward(x_q, w_q, gamma, beta))
    ref = cbr2d_reference(x_q, w_q, gamma, beta)
    assert out.shape == (N, Cout, H // 2, W // 2), out.shape
    err = float(jnp.max(jnp.abs(out - ref)))
    assert jnp.allclose(out, ref, atol=3e-3, rtol=3e-3), err

    # Second config exercises the multi-row-block (n_blocks > 1) tiled path.
    N2, H2, W2 = 1, 32, 32
    x2 = jax.random.normal(k_x2, (N2, Cin, H2, W2), dtype=jnp.float32)
    x2_q = x2.astype(jnp.bfloat16).astype(jnp.float32)
    out2 = jax.block_until_ready(cbr2d_forward(x2_q, w_q, gamma, beta, block_h=8))
    ref2 = cbr2d_reference(x2_q, w_q, gamma, beta)
    assert out2.shape == (N2, Cout, H2 // 2, W2 // 2), out2.shape
    err2 = float(jnp.max(jnp.abs(out2 - ref2)))
    assert jnp.allclose(out2, ref2, atol=3e-3, rtol=3e-3), err2

    print("KERNEL_OK")
</pallas_src>

<mosaic_0001>
module attributes {stable_mosaic.version = 11 : i64} {
  func.func @_conv_stats_kernel(%arg0: i32, %arg1: i32, %arg2: memref<1x8x8x72xbf16, #tpu.memory_space<vmem>>, %arg3: memref<16x8x8xbf16, #tpu.memory_space<vmem>>, %arg4: memref<1x8x64xbf16, #tpu.memory_space<vmem>>, %arg5: memref<1x8x1xf32, #tpu.memory_space<vmem>>, %arg6: memref<1x8x1xf32, #tpu.memory_space<vmem>>) attributes {dimension_semantics = [#tpu.dimension_semantics<parallel>, #tpu.dimension_semantics<parallel>], iteration_bounds = array<i64: 2, 1>, scalar_prefetch = 0 : i64, scratch_operands = 0 : i64, tpu.core_type = #tpu.core_type<tc>, window_params = [{transform_indices = @transform_0, window_bounds = array<i64: 1, 8, 8, 72>}, {pipeline_mode = #tpu.pipeline_mode<synchronous>, transform_indices = @transform_1, window_bounds = array<i64: 16, 8, 8>}, {transform_indices = @transform_2, window_bounds = array<i64: 1, 8, 64>}, {transform_indices = @transform_3, window_bounds = array<i64: 1, 8, 1>}, {transform_indices = @transform_4, window_bounds = array<i64: 1, 8, 1>}]} {
    %c0 = arith.constant 0 : index
    %c0_0 = arith.constant 0 : index
    %c0_1 = arith.constant 0 : index
    %c0_2 = arith.constant 0 : index
    %0 = vector.load %arg2[%c0, %c0_0, %c0_1, %c0_2] : memref<1x8x8x72xbf16, #tpu.memory_space<vmem>>, vector<1x1x8x72xbf16>
    %1 = vector.shape_cast %0 : vector<1x1x8x72xbf16> to vector<8x72xbf16>
    %2 = vector.extract_strided_slice %1 {offsets = [0, 0], sizes = [8, 64], strides = [1, 1]} : vector<8x72xbf16> to vector<8x64xbf16>
    %c0_3 = arith.constant 0 : index
    %c0_4 = arith.constant 0 : index
    %c0_5 = arith.constant 0 : index
    %3 = vector.load %arg3[%c0_3, %c0_4, %c0_5] : memref<16x8x8xbf16, #tpu.memory_space<vmem>>, vector<1x8x8xbf16>
    %4 = vector.shape_cast %3 : vector<1x8x8xbf16> to vector<8x8xbf16>
    %cst = arith.constant dense<0.000000e+00> : vector<8x64xf32>
    %5 = tpu.matmul %4, %2, %cst {dimension_numbers = #tpu.dot_dimension_numbers<[1], [0], [0], [1], [0, 0, 1, 1], [], []>} : vector<8x8xbf16>, vector<8x64xbf16>, vector<8x64xf32> -> vector<8x64xf32>
    %6 = vector.extract_strided_slice %1 {offsets = [0, 8], sizes = [8, 64], strides = [1, 1]} : vector<8x72xbf16> to vector<8x64xbf16>
    %c8 = arith.constant 8 : index
    %c0_6 = arith.constant 0 : index
    %c0_7 = arith.constant 0 : index
    %7 = vector.load %arg3[%c8, %c0_6, %c0_7] : memref<16x8x8xbf16, #tpu.memory_space<vmem>>, vector<1x8x8xbf16>
    %8 = vector.shape_cast %7 : vector<1x8x8xbf16> to vector<8x8xbf16>
    %cst_8 = arith.constant dense<0.000000e+00> : vector<8x64xf32>
    %9 = tpu.matmul %8, %6, %cst_8 {dimension_numbers = #tpu.dot_dimension_numbers<[1], [0], [0], [1], [0, 0, 1, 1], [], []>} : vector<8x8xbf16>, vector<8x64xbf16>, vector<8x64xf32> -> vector<8x64xf32>
    %10 = arith.addf %5, %9 : vector<8x64xf32>
    %c0_9 = arith.constant 0 : index
    %c1 = arith.constant 1 : index
    %c0_10 = arith.constant 0 : index
    %c0_11 = arith.constant 0 : index
    %11 = vector.load %arg2[%c0_9, %c1, %c0_10, %c0_11] : memref<1x8x8x72xbf16, #tpu.memory_space<vmem>>, vector<1x1x8x72xbf16>
    %12 = vector.shape_cast %11 : vector<1x1x8x72xbf16> to vector<8x72xbf16>
    %13 = vector.extract_strided_slice %12 {offsets = [0, 0], sizes = [8, 64], strides = [1, 1]} : vector<8x72xbf16> to vector<8x64xbf16>
    %c2 = arith.constant 2 : index
    %c0_12 = arith.constant 0 : index
    %c0_13 = arith.constant 0 : index
    %14 = vector.load %arg3[%c2, %c0_12, %c0_13] : memref<16x8x8xbf16, #tpu.memory_space<vmem>>, vector<1x8x8xbf16>
    %15 = vector.shape_cast %14 : vector<1x8x8xbf16> to vector<8x8xbf16>
    %cst_14 = arith.constant dense<0.000000e+00> : vector<8x64xf32>
    %16 = tpu.matmul %15, %13, %cst_14 {dimension_numbers = #tpu.dot_dimension_numbers<[1], [0], [0], [1], [0, 0, 1, 1], [], []>} : vector<8x8xbf16>, vector<8x64xbf16>, vector<8x64xf32> -> vector<8x64xf32>
    %17 = arith.addf %10, %16 : vector<8x64xf32>
    %18 = vector.extract_strided_slice %12 {offsets = [0, 8], sizes = [8, 64], strides = [1, 1]} : vector<8x72xbf16> to vector<8x64xbf16>
    %c10 = arith.constant 10 : index
    %c0_15 = arith.constant 0 : index
    %c0_16 = arith.constant 0 : index
    %19 = vector.load %arg3[%c10, %c0_15, %c0_16] : memref<16x8x8xbf16, #tpu.memory_space<vmem>>, vector<1x8x8xbf16>
    %20 = vector.shape_cast %19 : vector<1x8x8xbf16> to vector<8x8xbf16>
    %cst_17 = arith.constant dense<0.000000e+00> : vector<8x64xf32>
    %21 = tpu.matmul %20, %18, %cst_17 {dimension_numbers = #tpu.dot_dimension_numbers<[1], [0], [0], [1], [0, 0, 1, 1], [], []>} : vector<8x8xbf16>, vector<8x64xbf16>, vector<8x64xf32> -> vector<8x64xf32>
    %22 = arith.addf %17, %21 : vector<8x64xf32>
    %c0_18 = arith.constant 0 : index
    %c2_19 = arith.constant 2 : index
    %c0_20 = arith.constant 0 : index
    %c0_21 = arith.constant 0 : index
    %23 = vector.load %arg2[%c0_18, %c2_19, %c0_20, %c0_21] : memref<1x8x8x72xbf16, #tpu.memory_space<vmem>>, vector<1x1x8x72xbf16>
    %24 = vector.shape_cast %23 : vector<1x1x8x72xbf16> to vector<8x72xbf16>
    %25 = vector.extract_strided_slice %24 {offsets = [0, 0], sizes = [8, 64], strides = [1, 1]} : vector<8x72xbf16> to vector<8x64xbf16>
    %c1_22 = arith.constant 1 : index
    %c0_23 = arith.constant 0 : index
    %c0_24 = arith.constant 0 : index
    %26 = vector.load %arg3[%c1_22, %c0_23, %c0_24] : memref<16x8x8xbf16, #tpu.memory_space<vmem>>, vector<1x8x8xbf16>
    %27 = vector.shape_cast %26 : vector<1x8x8xbf16> to vector<8x8xbf16>
    %cst_25 = arith.constant dense<0.000000e+00> : vector<8x64xf32>
    %28 = tpu.matmul %27, %25, %cst_25 {dimension_numbers = #tpu.dot_dimension_numbers<[1], [0], [0], [1], [0, 0, 1, 1], [], []>} : vector<8x8xbf16>, vector<8x64xbf16>, vector<8x64xf32> -> vector<8x64xf32>
    %29 = arith.addf %22, %28 : vector<8x64xf32>
    %30 = vector.extract_strided_slice %24 {offsets = [0, 8], sizes = [8, 64], strides = [1, 1]} : vector<8x72xbf16> to vector<8x64xbf16>
    %c9 = arith.constant 9 : index
    %c0_26 = arith.constant 0 : index
    %c0_27 = arith.constant 0 : index
    %31 = vector.load %arg3[%c9, %c0_26, %c0_27] : memref<16x8x8xbf16, #tpu.memory_space<vmem>>, vector<1x8x8xbf16>
    %32 = vector.shape_cast %31 : vector<1x8x8xbf16> to vector<8x8xbf16>
    %cst_28 = arith.constant dense<0.000000e+00> : vector<8x64xf32>
    %33 = tpu.matmul %32, %30, %cst_28 {dimension_numbers = #tpu.dot_dimension_numbers<[1], [0], [0], [1], [0, 0, 1, 1], [], []>} : vector<8x8xbf16>, vector<8x64xbf16>, vector<8x64xf32> -> vector<8x64xf32>
    %34 = arith.addf %29, %33 : vector<8x64xf32>
    %c0_29 = arith.constant 0 : index
    %c3 = arith.constant 3 : index
    %c0_30 = arith.constant 0 : index
    %c0_31 = arith.constant 0 : index
    %35 = vector.load %arg2[%c0_29, %c3, %c0_30, %c0_31] : memref<1x8x8x72xbf16, #tpu.memory_space<vmem>>, vector<1x1x8x72xbf16>
    %36 = vector.shape_cast %35 : vector<1x1x8x72xbf16> to vector<8x72xbf16>
    %37 = vector.extract_strided_slice %36 {offsets = [0, 0], sizes = [8, 64], strides = [1, 1]} : vector<8x72xbf16> to vector<8x64xbf16>
    %c3_32 = arith.constant 3 : index
    %c0_33 = arith.constant 0 : index
    %c0_34 = arith.constant 0 : index
    %38 = vector.load %arg3[%c3_32, %c0_33, %c0_34] : memref<16x8x8xbf16, #tpu.memory_space<vmem>>, vector<1x8x8xbf16>
    %39 = vector.shape_cast %38 : vector<1x8x8xbf16> to vector<8x8xbf16>
    %cst_35 = arith.constant dense<0.000000e+00> : vector<8x64xf32>
    %40 = tpu.matmul %39, %37, %cst_35 {dimension_numbers = #tpu.dot_dimension_numbers<[1], [0], [0], [1], [0, 0, 1, 1], [], []>} : vector<8x8xbf16>, vector<8x64xbf16>, vector<8x64xf32> -> vector<8x64xf32>
    %41 = arith.addf %34, %40 : vector<8x64xf32>
    %42 = vector.extract_strided_slice %36 {offsets = [0, 8], sizes = [8, 64], strides = [1, 1]} : vector<8x72xbf16> to vector<8x64xbf16>
    %c11 = arith.constant 11 : index
    %c0_36 = arith.constant 0 : index
    %c0_37 = arith.constant 0 : index
    %43 = vector.load %arg3[%c11, %c0_36, %c0_37] : memref<16x8x8xbf16, #tpu.memory_space<vmem>>, vector<1x8x8xbf16>
    %44 = vector.shape_cast %43 : vector<1x8x8xbf16> to vector<8x8xbf16>
    %cst_38 = arith.constant dense<0.000000e+00> : vector<8x64xf32>
    %45 = tpu.matmul %44, %42, %cst_38 {dimension_numbers = #tpu.dot_dimension_numbers<[1], [0], [0], [1], [0, 0, 1, 1], [], []>} : vector<8x8xbf16>, vector<8x64xbf16>, vector<8x64xf32> -> vector<8x64xf32>
    %46 = arith.addf %41, %45 : vector<8x64xf32>
    %c0_39 = arith.constant 0 : index
    %c4 = arith.constant 4 : index
    %c0_40 = arith.constant 0 : index
    %c0_41 = arith.constant 0 : index
    %47 = vector.load %arg2[%c0_39, %c4, %c0_40, %c0_41] : memref<1x8x8x72xbf16, #tpu.memory_space<vmem>>, vector<1x1x8x72xbf16>
    %48 = vector.shape_cast %47 : vector<1x1x8x72xbf16> to vector<8x72xbf16>
    %49 = vector.extract_strided_slice %48 {offsets = [0, 0], sizes = [8, 64], strides = [1, 1]} : vector<8x72xbf16> to vector<8x64xbf16>
    %c4_42 = arith.constant 4 : index
    %c0_43 = arith.constant 0 : index
    %c0_44 = arith.constant 0 : index
    %50 = vector.load %arg3[%c4_42, %c0_43, %c0_44] : memref<16x8x8xbf16, #tpu.memory_space<vmem>>, vector<1x8x8xbf16>
    %51 = vector.shape_cast %50 : vector<1x8x8xbf16> to vector<8x8xbf16>
    %cst_45 = arith.constant dense<0.000000e+00> : vector<8x64xf32>
    %52 = tpu.matmul %51, %49, %cst_45 {dimension_numbers = #tpu.dot_dimension_numbers<[1], [0], [0], [1], [0, 0, 1, 1], [], []>} : vector<8x8xbf16>, vector<8x64xbf16>, vector<8x64xf32> -> vector<8x64xf32>
    %53 = arith.addf %46, %52 : vector<8x64xf32>
    %54 = vector.extract_strided_slice %48 {offsets = [0, 8], sizes = [8, 64], strides = [1, 1]} : vector<8x72xbf16> to vector<8x64xbf16>
    %c12 = arith.constant 12 : index
    %c0_46 = arith.constant 0 : index
    %c0_47 = arith.constant 0 : index
    %55 = vector.load %arg3[%c12, %c0_46, %c0_47] : memref<16x8x8xbf16, #tpu.memory_space<vmem>>, vector<1x8x8xbf16>
    %56 = vector.shape_cast %55 : vector<1x8x8xbf16> to vector<8x8xbf16>
    %cst_48 = arith.constant dense<0.000000e+00> : vector<8x64xf32>
    %57 = tpu.matmul %56, %54, %cst_48 {dimension_numbers = #tpu.dot_dimension_numbers<[1], [0], [0], [1], [0, 0, 1, 1], [], []>} : vector<8x8xbf16>, vector<8x64xbf16>, vector<8x64xf32> -> vector<8x64xf32>
    %58 = arith.addf %53, %57 : vector<8x64xf32>
    %c0_49 = arith.constant 0 : index
    %c5 = arith.constant 5 : index
    %c0_50 = arith.constant 0 : index
    %c0_51 = arith.constant 0 : index
    %59 = vector.load %arg2[%c0_49, %c5, %c0_50, %c0_51] : memref<1x8x8x72xbf16, #tpu.memory_space<vmem>>, vector<1x1x8x72xbf16>
    %60 = vector.shape_cast %59 : vector<1x1x8x72xbf16> to vector<8x72xbf16>
    %61 = vector.extract_strided_slice %60 {offsets = [0, 0], sizes = [8, 64], strides = [1, 1]} : vector<8x72xbf16> to vector<8x64xbf16>
    %c6 = arith.constant 6 : index
    %c0_52 = arith.constant 0 : index
    %c0_53 = arith.constant 0 : index
    %62 = vector.load %arg3[%c6, %c0_52, %c0_53] : memref<16x8x8xbf16, #tpu.memory_space<vmem>>, vector<1x8x8xbf16>
    %63 = vector.shape_cast %62 : vector<1x8x8xbf16> to vector<8x8xbf16>
    %cst_54 = arith.constant dense<0.000000e+00> : vector<8x64xf32>
    %64 = tpu.matmul %63, %61, %cst_54 {dimension_numbers = #tpu.dot_dimension_numbers<[1], [0], [0], [1], [0, 0, 1, 1], [], []>} : vector<8x8xbf16>, vector<8x64xbf16>, vector<8x64xf32> -> vector<8x64xf32>
    %65 = arith.addf %58, %64 : vector<8x64xf32>
    %66 = vector.extract_strided_slice %60 {offsets = [0, 8], sizes = [8, 64], strides = [1, 1]} : vector<8x72xbf16> to vector<8x64xbf16>
    %c14 = arith.constant 14 : index
    %c0_55 = arith.constant 0 : index
    %c0_56 = arith.constant 0 : index
    %67 = vector.load %arg3[%c14, %c0_55, %c0_56] : memref<16x8x8xbf16, #tpu.memory_space<vmem>>, vector<1x8x8xbf16>
    %68 = vector.shape_cast %67 : vector<1x8x8xbf16> to vector<8x8xbf16>
    %cst_57 = arith.constant dense<0.000000e+00> : vector<8x64xf32>
    %69 = tpu.matmul %68, %66, %cst_57 {dimension_numbers = #tpu.dot_dimension_numbers<[1], [0], [0], [1], [0, 0, 1, 1], [], []>} : vector<8x8xbf16>, vector<8x64xbf16>, vector<8x64xf32> -> vector<8x64xf32>
    %70 = arith.addf %65, %69 : vector<8x64xf32>
    %c0_58 = arith.constant 0 : index
    %c6_59 = arith.constant 6 : index
    %c0_60 = arith.constant 0 : index
    %c0_61 = arith.constant 0 : index
    %71 = vector.load %arg2[%c0_58, %c6_59, %c0_60, %c0_61] : memref<1x8x8x72xbf16, #tpu.memory_space<vmem>>, vector<1x1x8x72xbf16>
    %72 = vector.shape_cast %71 : vector<1x1x8x72xbf16> to vector<8x72xbf16>
    %73 = vector.extract_strided_slice %72 {offsets = [0, 0], sizes = [8, 64], strides = [1, 1]} : vector<8x72xbf16> to vector<8x64xbf16>
    %c5_62 = arith.constant 5 : index
    %c0_63 = arith.constant 0 : index
    %c0_64 = arith.constant 0 : index
    %74 = vector.load %arg3[%c5_62, %c0_63, %c0_64] : memref<16x8x8xbf16, #tpu.memory_space<vmem>>, vector<1x8x8xbf16>
    %75 = vector.shape_cast %74 : vector<1x8x8xbf16> to vector<8x8xbf16>
    %cst_65 = arith.constant dense<0.000000e+00> : vector<8x64xf32>
    %76 = tpu.matmul %75, %73, %cst_65 {dimension_numbers = #tpu.dot_dimension_numbers<[1], [0], [0], [1], [0, 0, 1, 1], [], []>} : vector<8x8xbf16>, vector<8x64xbf16>, vector<8x64xf32> -> vector<8x64xf32>
    %77 = arith.addf %70, %76 : vector<8x64xf32>
    %78 = vector.extract_strided_slice %72 {offsets = [0, 8], sizes = [8, 64], strides = [1, 1]} : vector<8x72xbf16> to vector<8x64xbf16>
    %c13 = arith.constant 13 : index
    %c0_66 = arith.constant 0 : index
    %c0_67 = arith.constant 0 : index
    %79 = vector.load %arg3[%c13, %c0_66, %c0_67] : memref<16x8x8xbf16, #tpu.memory_space<vmem>>, vector<1x8x8xbf16>
    %80 = vector.shape_cast %79 : vector<1x8x8xbf16> to vector<8x8xbf16>
    %cst_68 = arith.constant dense<0.000000e+00> : vector<8x64xf32>
    %81 = tpu.matmul %80, %78, %cst_68 {dimension_numbers = #tpu.dot_dimension_numbers<[1], [0], [0], [1], [0, 0, 1, 1], [], []>} : vector<8x8xbf16>, vector<8x64xbf16>, vector<8x64xf32> -> vector<8x64xf32>
    %82 = arith.addf %77, %81 : vector<8x64xf32>
    %c0_69 = arith.constant 0 : index
    %c7 = arith.constant 7 : index
    %c0_70 = arith.constant 0 : index
    %c0_71 = arith.constant 0 : index
    %83 = vector.load %arg2[%c0_69, %c7, %c0_70, %c0_71] : memref<1x8x8x72xbf16, #tpu.memory_space<vmem>>, vector<1x1x8x72xbf16>
    %84 = vector.shape_cast %83 : vector<1x1x8x72xbf16> to vector<8x72xbf16>
    %85 = vector.extract_strided_slice %84 {offsets = [0, 0], sizes = [8, 64], strides = [1, 1]} : vector<8x72xbf16> to vector<8x64xbf16>
    %c7_72 = arith.constant 7 : index
    %c0_73 = arith.constant 0 : index
    %c0_74 = arith.constant 0 : index
    %86 = vector.load %arg3[%c7_72, %c0_73, %c0_74] : memref<16x8x8xbf16, #tpu.memory_space<vmem>>, vector<1x8x8xbf16>
    %87 = vector.shape_cast %86 : vector<1x8x8xbf16> to vector<8x8xbf16>
    %cst_75 = arith.constant dense<0.000000e+00> : vector<8x64xf32>
    %88 = tpu.matmul %87, %85, %cst_75 {dimension_numbers = #tpu.dot_dimension_numbers<[1], [0], [0], [1], [0, 0, 1, 1], [], []>} : vector<8x8xbf16>, vector<8x64xbf16>, vector<8x64xf32> -> vector<8x64xf32>
    %89 = arith.addf %82, %88 : vector<8x64xf32>
    %90 = vector.extract_strided_slice %84 {offsets = [0, 8], sizes = [8, 64], strides = [1, 1]} : vector<8x72xbf16> to vector<8x64xbf16>
    %c15 = arith.constant 15 : index
    %c0_76 = arith.constant 0 : index
    %c0_77 = arith.constant 0 : index
    %91 = vector.load %arg3[%c15, %c0_76, %c0_77] : memref<16x8x8xbf16, #tpu.memory_space<vmem>>, vector<1x8x8xbf16>
    %92 = vector.shape_cast %91 : vector<1x8x8xbf16> to vector<8x8xbf16>
    %cst_78 = arith.constant dense<0.000000e+00> : vector<8x64xf32>
    %93 = tpu.matmul %92, %90, %cst_78 {dimension_numbers = #tpu.dot_dimension_numbers<[1], [0], [0], [1], [0, 0, 1, 1], [], []>} : vector<8x8xbf16>, vector<8x64xbf16>, vector<8x64xf32> -> vector<8x64xf32>
    %94 = arith.addf %89, %93 : vector<8x64xf32>
    %95 = arith.truncf %94 : vector<8x64xf32> to vector<8x64xbf16>
    %c0_79 = arith.constant 0 : index
    %c0_80 = arith.constant 0 : index
    %c0_81 = arith.constant 0 : index
    %96 = vector.load %arg4[%c0_79, %c0_80, %c0_81] : memref<1x8x64xbf16, #tpu.memory_space<vmem>>, vector<1x8x64xbf16>
    %97 = vector.shape_cast %96 : vector<1x8x64xbf16> to vector<8x64xbf16>
    %98 = vector.shape_cast %95 : vector<8x64xbf16> to vector<1x8x64xbf16>
    tpu.vector_store %arg4[%c0_79, %c0_80, %c0_81], %98 {strides = array<i32>} : memref<1x8x64xbf16, #tpu.memory_space<vmem>>, vector<1x8x64xbf16>,
    %cst_82 = arith.constant dense<0.000000e+00> : vector<8xf32>
    %99 = vector.multi_reduction <add>, %94, %cst_82 [1] : vector<8x64xf32> to vector<8xf32>
    %100 = vector.shape_cast %99 : vector<8xf32> to vector<8x1xf32>
    %cst_83 = arith.constant 1.562500e-02 : f32
    %101 = vector.broadcast %cst_83 : f32 to vector<8x1xf32>
    %102 = arith.mulf %100, %101 : vector<8x1xf32>
    %103 = vector.broadcast %102 : vector<8x1xf32> to vector<8x64xf32>
    %104 = arith.subf %94, %103 : vector<8x64xf32>
    %105 = vector.broadcast %102 : vector<8x1xf32> to vector<8x64xf32>
    %106 = arith.subf %94, %105 : vector<8x64xf32>
    %107 = arith.mulf %104, %106 : vector<8x64xf32>
    %cst_84 = arith.constant dense<0.000000e+00> : vector<8xf32>
    %108 = vector.multi_reduction <add>, %107, %cst_84 [1] : vector<8x64xf32> to vector<8xf32>
    %109 = vector.shape_cast %108 : vector<8xf32> to vector<8x1xf32>
    %c0_85 = arith.constant 0 : index
    %c0_86 = arith.constant 0 : index
    %c0_87 = arith.constant 0 : index
    %110 = vector.load %arg5[%c0_85, %c0_86, %c0_87] : memref<1x8x1xf32, #tpu.memory_space<vmem>>, vector<1x8x1xf32>
    %111 = vector.shape_cast %110 : vector<1x8x1xf32> to vector<8x1xf32>
    %112 = vector.shape_cast %100 : vector<8x1xf32> to vector<1x8x1xf32>
    tpu.vector_store %arg5[%c0_85, %c0_86, %c0_87], %112 {strides = array<i32>} : memref<1x8x1xf32, #tpu.memory_space<vmem>>, vector<1x8x1xf32>,
    %c0_88 = arith.constant 0 : index
    %c0_89 = arith.constant 0 : index
    %c0_90 = arith.constant 0 : index
    %113 = vector.load %arg6[%c0_88, %c0_89, %c0_90] : memref<1x8x1xf32, #tpu.memory_space<vmem>>, vector<1x8x1xf32>
    %114 = vector.shape_cast %113 : vector<1x8x1xf32> to vector<8x1xf32>
    %115 = vector.shape_cast %109 : vector<8x1xf32> to vector<1x8x1xf32>
    tpu.vector_store %arg6[%c0_88, %c0_89, %c0_90], %115 {strides = array<i32>} : memref<1x8x1xf32, #tpu.memory_space<vmem>>, vector<1x8x1xf32>,
    return
  }
  func.func @transform_0(%arg0: i32, %arg1: i32) -> (i32, i32, i32, i32) {
    %c1_i32 = arith.constant 1 : i32
    %0 = arith.muli %arg0, %c1_i32 : i32
    %1 = arith.addi %0, %arg1 : i32
    %c0_i32 = arith.constant 0 : i32
    %c0_i32_0 = arith.constant 0 : i32
    %c0_i32_1 = arith.constant 0 : i32
    %c0_i32_2 = arith.constant 0 : i32
    return %1, %c0_i32, %c0_i32_0, %c0_i32_1 : i32, i32, i32, i32
  }
  func.func @transform_1(%arg0: i32, %arg1: i32) -> (i32, i32, i32) {
    %c0_i32 = arith.constant 0 : i32
    %c0_i32_0 = arith.constant 0 : i32
    %c0_i32_1 = arith.constant 0 : i32
    %c0_i32_2 = arith.constant 0 : i32
    return %c0_i32, %c0_i32_0, %c0_i32_1 : i32, i32, i32
  }
  func.func @transform_2(%arg0: i32, %arg1: i32) -> (i32, i32, i32) {
    %c0_i32 = arith.constant 0 : i32
    %c0_i32_0 = arith.constant 0 : i32
    return %arg0, %c0_i32, %arg1 : i32, i32, i32
  }
  func.func @transform_3(%arg0: i32, %arg1: i32) -> (i32, i32, i32) {
    %c1_i32 = arith.constant 1 : i32
    %0 = arith.muli %arg0, %c1_i32 : i32
    %1 = arith.addi %0, %arg1 : i32
    %c0_i32 = arith.constant 0 : i32
    %c0_i32_0 = arith.constant 0 : i32
    %c0_i32_1 = arith.constant 0 : i32
    return %1, %c0_i32, %c0_i32_0 : i32, i32, i32
  }
  func.func @transform_4(%arg0: i32, %arg1: i32) -> (i32, i32, i32) {
    %c1_i32 = arith.constant 1 : i32
    %0 = arith.muli %arg0, %c1_i32 : i32
    %1 = arith.addi %0, %arg1 : i32
    %c0_i32 = arith.constant 0 : i32
    %c0_i32_0 = arith.constant 0 : i32
    %c0_i32_1 = arith.constant 0 : i32
    return %1, %c0_i32, %c0_i32_0 : i32, i32, i32
  }
}

</mosaic_0001>

<llo_original>
// kernel: tpu_custom_call.1
$region0: #{tpu_custom_call.1}
  #allocation0 [shape = 'u32[]', space=smem, size = 0x4, offset = 0x4, fixed_abs, tag = 'smem constant byte address 0x4 - core index']
  #allocation1 [shape = 'u32[144,128]{1,0:T(1,128)}', space=vmem, size = 0x12000, scoped, tag = 'internal scratch']
  %s0 = inlined_call_operand.vmem [shape: bf16[2,8,8,72], index: 0, kind: input, shape index: {}]
  %s1 = inlined_call_operand.vmem [shape: bf16[16,8,8], index: 1, kind: input, shape index: {}]
  %s2 = inlined_call_operand.hbm [shape: bf16[2,8,64], index: 2, kind: output, shape index: {0}]
  %s3 = inlined_call_operand.vmem [shape: f32[2,8,1], index: 3, kind: output, shape index: {1}]
  %s4 = inlined_call_operand.vmem [shape: f32[2,8,1], index: 4, kind: output, shape index: {2}]
  %5 = xla_tuple %s2, %s3, %s4
  %s6 = sld [smem:[#allocation0]]
  $region57: #{tpu_custom_call.1} parent=0
    _
  %s8 = ssub.s32 1, %s6
  %s9 = scalar_select 0, %s8, %s6
  $region1: #{tpu_custom_call.1} parent=0
    #allocation2 [shape = 'u8[4096]{0}', space=vmem, size = 0x1000, scoped, tag = 'output window, operand 0']
    #allocation3 [shape = 's32[2]{0}', space=sflag, size = 0x8, scoped, tag = 'scoped memory for tpu_custom_call.1']
    %10 = vsyncpa [#allocation3], 0
    %s11 = scalar_lea.sflag [#allocation3], 1
    %12 = vsyncpa %s11, 0
    loop: start=0, step=1, limit=4
    $region2: #{tpu_custom_call.1} parent=1 // loop_pre_header
      _
    $region3: #{tpu_custom_call.1} parent=1 // loop_header
      %s14 = sphi 0, %s18
      %p15 = scmp.ge.s32.totalorder %s14, 4
      %s21 = sphi 0, %s33
      %s22 = sphi 0, %s29
      %s23 = sphi 0, %s21
      %s24 = sphi 0, %s22
      %s25 = sphi 0, %s23
      %s26 = sphi 0, %s24
      %s38 = sphi 0, %s40
      %s41 = sphi 0, %s38
      %s42 = sphi 0, %s41
      %s58 = sphi 0, %s42
      %s62 = sphi 0, %s62
      %s64 = sphi 0, %s62
      %s65 = sphi 0, %s64
      %s79 = sphi 0, %s65
      %s87 = sphi 0, %s89
      %s90 = sphi 0, %s87
      %s91 = sphi 0, %s90
      %s107 = sphi 0, %s91
      %s115 = sphi 0, %s117
      %s118 = sphi 0, %s115
      %s119 = sphi 0, %s118
      %s135 = sphi 0, %s119
      %s143 = sphi 0, %s145
      %s146 = sphi 0, %s143
      %s147 = sphi 0, %s146
      %s163 = sphi 0, %s147
    $region4: #{tpu_custom_call.1} parent=1 // loop_header_branch
      %17 = sbr.rel (%p15) target = $region8
    $region5: #{tpu_custom_call.1} parent=1 // loop_body
      %s19 = ssub.s32 %s14, 1
      %s20 = ssub.s32 %s14, 2
      %s27 = sadd.s32 1, %s22
      %p28 = scmp.ge.s32.totalorder %s27, 1
      %s29 = scalar_select %p28, 0, %s27
      %s30 = sadd.s32 1, %s21
      %s31 = scalar_select %p28, %s30, %s21
      %p32 = scmp.ge.s32.totalorder %s31, 2
      %s33 = scalar_select %p32, 0, %s31
      %s34 = sadd.s32 %s21, %s22
      %s35 = sadd.s32 %s33, %s29
      %s36 = ssub.s32 %s34, %s35
      %p37 = scmp.eq.s32.totalorder %s36, 0
      %s39 = sadd.s32 %s38, 1
      %s40 = scalar_select %p37, %s38, %s39
      %p43 = pneg %p37
      %p44 = scmp.eq.s32.totalorder %s14, 1
      %p45 = por %p43, %p44
      %p46 = scmp.ne.s32.totalorder %s38, %s41
      %p47 = scmp.eq.s32.totalorder %s14, 0
      %p48 = por %p46, %p47
      %p49 = scmp.ne.s32.totalorder %s38, %s41
      %p50 = scmp.eq.s32.totalorder %s19, 1
      %p51 = por %p49, %p50
      %p52 = scmp.ne.s32.totalorder %s41, %s42
      %p53 = scmp.eq.s32.totalorder %s19, 0
      %p54 = por %p52, %p53
      %p55 = scmp.ne.s32.totalorder %s41, %s42
      %p56 = scmp.eq.s32.totalorder %s20, 1
      %p57 = por %p55, %p56
      %p59 = scmp.ne.s32.totalorder %s42, %s58
      %p60 = scmp.eq.s32.totalorder %s20, 0
      %p61 = por %p59, %p60
      %s63 = sadd.s32 %s62, 1
      %p66 = scmp.eq.s32.totalorder %s14, 1
      %p67 = scmp.ne.s32.totalorder %s62, %s64
      %p68 = scmp.eq.s32.totalorder %s14, 0
      %p69 = por %p67, %p68
      %p70 = scmp.ne.s32.totalorder %s62, %s64
      %p71 = scmp.eq.s32.totalorder %s19, 1
      %p72 = por %p70, %p71
      %p73 = scmp.ne.s32.totalorder %s64, %s65
      %p74 = scmp.eq.s32.totalorder %s19, 0
      %p75 = por %p73, %p74
      %p76 = scmp.ne.s32.totalorder %s64, %s65
      %p77 = scmp.eq.s32.totalorder %s20, 1
      %p78 = por %p76, %p77
      %p80 = scmp.ne.s32.totalorder %s65, %s79
      %p81 = scmp.eq.s32.totalorder %s20, 0
      %p82 = por %p80, %p81
      %s83 = ssub.s32 %s21, %s33
      %s84 = ssub.s32 %s22, %s29
      %s85 = sor.u32 %s83, %s84
      %p86 = scmp.eq.s32.totalorder %s85, 0
      %s88 = sadd.s32 %s87, 1
      %s89 = scalar_select %p86, %s87, %s88
      %p92 = pneg %p86
      %p93 = scmp.eq.s32.totalorder %s14, 1
      %p94 = por %p92, %p93
      %p95 = scmp.ne.s32.totalorder %s87, %s90
      %p96 = scmp.eq.s32.totalorder %s14, 0
      %p97 = por %p95, %p96
      %p98 = scmp.ne.s32.totalorder %s87, %s90
      %p99 = scmp.eq.s32.totalorder %s19, 1
      %p100 = por %p98, %p99
      %p101 = scmp.ne.s32.totalorder %s90, %s91
      %p102 = scmp.eq.s32.totalorder %s19, 0
      %p103 = por %p101, %p102
      %p104 = scmp.ne.s32.totalorder %s90, %s91
      %p105 = scmp.eq.s32.totalorder %s20, 1
      %p106 = por %p104, %p105
      %p108 = scmp.ne.s32.totalorder %s91, %s107
      %p109 = scmp.eq.s32.totalorder %s20, 0
      %p110 = por %p108, %p109
      %s111 = sadd.s32 %s21, %s22
      %s112 = sadd.s32 %s33, %s29
      %s113 = ssub.s32 %s111, %s112
      %p114 = scmp.eq.s32.totalorder %s113, 0
      %s116 = sadd.s32 %s115, 1
      %s117 = scalar_select %p114, %s115, %s116
      %p120 = pneg %p114
      %p121 = scmp.eq.s32.totalorder %s14, 1
      %p122 = por %p120, %p121
      %p123 = scmp.ne.s32.totalorder %s115, %s118
      %p124 = scmp.eq.s32.totalorder %s14, 0
      %p125 = por %p123, %p124
      %p126 = scmp.ne.s32.totalorder %s115, %s118
      %p127 = scmp.eq.s32.totalorder %s19, 1
      %p128 = por %p126, %p127
      %p129 = scmp.ne.s32.totalorder %s118, %s119
      %p130 = scmp.eq.s32.totalorder %s19, 0
      %p131 = por %p129, %p130
      %p132 = scmp.ne.s32.totalorder %s118, %s119
      %p133 = scmp.eq.s32.totalorder %s20, 1
      %p134 = por %p132, %p133
      %p136 = scmp.ne.s32.totalorder %s119, %s135
      %p137 = scmp.eq.s32.totalorder %s20, 0
      %p138 = por %p136, %p137
      %s139 = sadd.s32 %s21, %s22
      %s140 = sadd.s32 %s33, %s29
      %s141 = ssub.s32 %s139, %s140
      %p142 = scmp.eq.s32.totalorder %s141, 0
      %s144 = sadd.s32 %s143, 1
      %s145 = scalar_select %p142, %s143, %s144
      %p148 = pneg %p142
      %p149 = scmp.eq.s32.totalorder %s14, 1
      %p150 = por %p148, %p149
      %p151 = scmp.ne.s32.totalorder %s143, %s146
      %p152 = scmp.eq.s32.totalorder %s14, 0
      %p153 = por %p151, %p152
      %p154 = scmp.ne.s32.totalorder %s143, %s146
      %p155 = scmp.eq.s32.totalorder %s19, 1
      %p156 = por %p154, %p155
      %p157 = scmp.ne.s32.totalorder %s146, %s147
      %p158 = scmp.eq.s32.totalorder %s19, 0
      %p159 = por %p157, %p158
      %p160 = scmp.ne.s32.totalorder %s146, %s147
      %p161 = scmp.eq.s32.totalorder %s20, 1
      %p162 = por %p160, %p161
      %p164 = scmp.ne.s32.totalorder %s147, %s163
      %p165 = scmp.eq.s32.totalorder %s20, 0
      %p166 = por %p164, %p165
      %p167 = scmp.le.s32.totalorder 1, %s14
      %p168 = scmp.lt.s32.totalorder %s14, 3
      %p169 = pnand %p167, %p168
      %p170 = pneg %p169
      // Predicated region
      $region9: #{tpu_custom_call.1} parent=5 // pred_check
        _
      $region10: #{tpu_custom_call.1} parent=5 // pred_check_branch
        %172 = sbr.rel (%p169) target = $region12
      $region11: #{tpu_custom_call.1} parent=5 // pred_region
        %s173 = ssub.s32 %s14, 1
        // Predicated region
        $region13: #{tpu_custom_call.1} parent=11 // pred_check
          %p174 = pneg %p75
        $region14: #{tpu_custom_call.1} parent=11 // pred_check_branch
          %176 = sbr.rel (%p174) target = $region16
        $region15: #{tpu_custom_call.1} parent=11 // pred_region
          _
        $region16: #{tpu_custom_call.1} parent=11 // pred_fallthru
          _
      $region12: #{tpu_custom_call.1} parent=5 // pred_fallthru
        _
      %p177 = scmp.lt.s32.totalorder %s14, 2
      // Predicated region
      $region17: #{tpu_custom_call.1} parent=5 // pred_check
        %p178 = pneg %p177
      $region18: #{tpu_custom_call.1} parent=5 // pred_check_branch
        %180 = sbr.rel (%p178) target = $region20
      $region19: #{tpu_custom_call.1} parent=5 // pred_region
        // Predicated region
        $region21: #{tpu_custom_call.1} parent=19 // pred_check
          %p181 = pneg %p48
        $region22: #{tpu_custom_call.1} parent=19 // pred_check_branch
          %183 = sbr.rel (%p181) target = $region24
        $region23: #{tpu_custom_call.1} parent=19 // pred_region
          %s184 = sadd.s32 %s21, %s22
          %p185 = scmp.lt.s32.totalorder %s184, 1
          %s186 = scalar_select %p185, %s184, 1
          %s187 = smul.addr %s186, 8
          %s188 = smul.addr %s187, 4
          %s189 = scalar_lea.vmem %s0, %s188
          %s190 = sadd.s32 %s21, %s22
        $region24: #{tpu_custom_call.1} parent=19 // pred_fallthru
          _
      $region20: #{tpu_custom_call.1} parent=5 // pred_fallthru
        _
      %p191 = scmp.le.s32.totalorder 1, %s14
      %p192 = scmp.lt.s32.totalorder %s14, 3
      %p193 = pnand %p191, %p192
      %p194 = pneg %p193
      // Predicated region
      $region25: #{tpu_custom_call.1} parent=5 // pred_check
        _
      $region26: #{tpu_custom_call.1} parent=5 // pred_check_branch
        %196 = sbr.rel (%p193) target = $region28
      $region27: #{tpu_custom_call.1} parent=5 // pred_region
        %s197 = ssub.s32 %s14, 1
        %s198 = sadd.s32 %s23, %s24
        %p199 = scmp.lt.s32.totalorder %s198, 1
        %s200 = scalar_select %p199, %s198, 1
        %s201 = smul.addr %s200, 8
        %s202 = smul.addr %s201, 4
        %s203 = scalar_lea.vmem %s0, %s202
        %p204 = pneg %p54
        %p205 = pneg %p51
        %p206 = pneg %p75
        %p207 = pneg %p72
        %p208 = pneg %p103
        %p209 = pneg %p100
        %s210 = sand.u32 %s90, 1
        %s211 = scalar_lea.sflag [#allocation3], %s210
        %s212 = sand.u32 %s90, 1
        %s213 = smul.addr %s212, 4
        %s214 = scalar_lea.vmem [#allocation2], %s213
        %p215 = pneg %p131
        %p216 = pneg %p128
        %s217 = sadd.s32 %s23, %s24
        %p218 = scmp.lt.s32.totalorder %s217, 1
        %s219 = scalar_select %p218, %s217, 1
        %s220 = smul.addr %s219, 8
        %s221 = scalar_lea.vmem %s3, %s220
        %p222 = pneg %p159
        %p223 = pneg %p156
        %s224 = sadd.s32 %s23, %s24
        %p225 = scmp.lt.s32.totalorder %s224, 1
        %s226 = scalar_select %p225, %s224, 1
        %s227 = smul.addr %s226, 8
        %s228 = scalar_lea.vmem %s4, %s227
        %s229 = sadd.s32 %s23, %s24
        %p230 = scmp.lt.s32.totalorder %s229, 1
        %s231 = scalar_select %p230, %s229, 1
        %s232 = smul.addr %s231, 8
        %s233 = smul.addr %s232, 4
        %s234 = scalar_lea.vmem %s0, %s233
        %s235 = sadd.s32 %s23, %s24
        %s236 = sadd.s32 %s23, %s24
        %p237 = scmp.lt.s32.totalorder %s236, 1
        %s238 = scalar_select %p237, %s236, 1
        %s239 = smul.addr %s238, 8
        %s240 = scalar_lea.vmem %s3, %s239
        %s241 = sadd.s32 %s23, %s24
        %s242 = sadd.s32 %s23, %s24
        %p243 = scmp.lt.s32.totalorder %s242, 1
        %s244 = scalar_select %p243, %s242, 1
        %s245 = smul.addr %s244, 8
        %s246 = scalar_lea.vmem %s4, %s245
        %s247 = sadd.s32 %s23, %s24
        %v249 = vld [vmem:[%s234] sm:$0xf]
        %v250 = vld [vmem:[%s1] sm:$0xf]
        %s251 = scalar_lea.vmem %s1, 32
        %v252 = vld [vmem:[%s251] sm:$0xf]
        %v254 = vunpack.c.l.b16 %v249
        %v255 = vpack.c.b16 %v254, %v254
        %256 = vrot.lane.b32.xlu0 %v255, 120
        %v257 = vpop.permute.xlu0 %256
        %vm258 = vcmask 64512
        %v260 = vsel %vm258, %v252, 0
        %vm262 = vcmask 1043456
        %v264 = vsel %vm262, %v257, 0
        %266 = vmatprep.subr.bf16.mxu0 0
        %267 = vmatpush1.bf16.msra.mxu0 %v264
        %268 = vmatprep.subr.bf16.mxu0 0
        %269 = vmatpush1.bf16.msra.mxu0 0
        %270 = vmatprep.subr.bf16.mxu0 0
        %271 = vmatpush1.bf16.msra.mxu0 0
        %272 = vmatprep.subr.bf16.mxu0 0
        %273 = vmatpush1.bf16.msra.mxu0 0
        %274 = vmatprep.subr.bf16.mxu0 0
        %275 = vmatpush1.bf16.msra.mxu0 0
        %276 = vmatprep.subr.bf16.mxu0 0
        %277 = vmatpush1.bf16.msra.mxu0 0
        %278 = vmatprep.subr.bf16.mxu0 0
        %279 = vmatpush1.bf16.msra.mxu0 0
        %280 = vmatprep.subr.bf16.mxu0 0
        %281 = vmatpush1.bf16.msra.mxu0 0
        %282 = vmatprep.subr.bf16.mxu0 0
        %283 = vmatpush1.bf16.msra.mxu0 0
        %284 = vmatprep.subr.bf16.mxu0 0
        %285 = vmatpush1.bf16.msra.mxu0 0
        %286 = vmatprep.subr.bf16.mxu0 0
        %287 = vmatpush1.bf16.msra.mxu0 0
        %288 = vmatprep.subr.bf16.mxu0 0
        %289 = vmatpush1.bf16.msra.mxu0 0
        %290 = vmatprep.subr.bf16.mxu0 0
        %291 = vmatpush1.bf16.msra.mxu0 0
        %292 = vmatprep.subr.bf16.mxu0 0
        %293 = vmatpush1.bf16.msra.mxu0 0
        %294 = vmatprep.subr.bf16.mxu0 0
        %295 = vmatpush1.bf16.msra.mxu0 0
        %296 = vmatprep.subr.bf16.mxu0 0
        %297 = vmatpush1.bf16.msra.mxu0 0
        %298 = vmatprep.mubr.bf16.mxu0 0
        %299 = vmatmul.mubr.bf16.gmra.mrb[0].mxu0 %v260
        %v300 = vpop.f32.mrb[0].mxu0
        %v301 = vadd.f32 0.0, %v300
        %v302 = vpop.f32.mrb[0].mxu0
        %v303 = vpop.f32.mrb[0].mxu0
        %v304 = vpop.f32.mrb[0].mxu0
        %305 = vdwg.mxu0
        %v307 = vsel %vm258, %v250, 0
        %v310 = vsel %vm262, %v249, 0
        %312 = vmatprep.subr.bf16.mxu0 0
        %313 = vmatpush1.bf16.msra.mxu0 %v310
        %314 = vmatprep.subr.bf16.mxu0 0
        %315 = vmatpush1.bf16.msra.mxu0 0
        %316 = vmatprep.subr.bf16.mxu0 0
        %317 = vmatpush1.bf16.msra.mxu0 0
        %318 = vmatprep.subr.bf16.mxu0 0
        %319 = vmatpush1.bf16.msra.mxu0 0
        %320 = vmatprep.subr.bf16.mxu0 0
        %321 = vmatpush1.bf16.msra.mxu0 0
        %322 = vmatprep.subr.bf16.mxu0 0
        %323 = vmatpush1.bf16.msra.mxu0 0
        %324 = vmatprep.subr.bf16.mxu0 0
        %325 = vmatpush1.bf16.msra.mxu0 0
        %326 = vmatprep.subr.bf16.mxu0 0
        %327 = vmatpush1.bf16.msra.mxu0 0
        %328 = vmatprep.subr.bf16.mxu0 0
        %329 = vmatpush1.bf16.msra.mxu0 0
        %330 = vmatprep.subr.bf16.mxu0 0
        %331 = vmatpush1.bf16.msra.mxu0 0
        %332 = vmatprep.subr.bf16.mxu0 0
        %333 = vmatpush1.bf16.msra.mxu0 0
        %334 = vmatprep.subr.bf16.mxu0 0
        %335 = vmatpush1.bf16.msra.mxu0 0
        %336 = vmatprep.subr.bf16.mxu0 0
        %337 = vmatpush1.bf16.msra.mxu0 0
        %338 = vmatprep.subr.bf16.mxu0 0
        %339 = vmatpush1.bf16.msra.mxu0 0
        %340 = vmatprep.subr.bf16.mxu0 0
        %341 = vmatpush1.bf16.msra.mxu0 0
        %342 = vmatprep.subr.bf16.mxu0 0
        %343 = vmatpush1.bf16.msra.mxu0 0
        %344 = vmatprep.mubr.bf16.mxu0 0
        %345 = vmatmul.mubr.bf16.gmra.mrb[0].mxu0 %v307
        %v346 = vpop.f32.mrb[0].mxu0
        %v347 = vadd.f32 %v301, %v346
        %v348 = vpop.f32.mrb[0].mxu0
        %v349 = vpop.f32.mrb[0].mxu0
        %v350 = vpop.f32.mrb[0].mxu0
        %351 = vdwg.mxu0
        %s352 = scalar_lea.vmem %s234, 4
        %v353 = vld [vmem:[%s352] sm:$0xf]
        %s354 = scalar_lea.vmem %s1, 8
        %v355 = vld [vmem:[%s354] sm:$0xf]
        %v357 = vsel %vm258, %v355, 0
        %v360 = vsel %vm262, %v353, 0
        %362 = vmatprep.subr.bf16.mxu0 0
        %363 = vmatpush1.bf16.msra.mxu0 %v360
        %364 = vmatprep.subr.bf16.mxu0 0
        %365 = vmatpush1.bf16.msra.mxu0 0
        %366 = vmatprep.subr.bf16.mxu0 0
        %367 = vmatpush1.bf16.msra.mxu0 0
        %368 = vmatprep.subr.bf16.mxu0 0
        %369 = vmatpush1.bf16.msra.mxu0 0
        %370 = vmatprep.subr.bf16.mxu0 0
        %371 = vmatpush1.bf16.msra.mxu0 0
        %372 = vmatprep.subr.bf16.mxu0 0
        %373 = vmatpush1.bf16.msra.mxu0 0
        %374 = vmatprep.subr.bf16.mxu0 0
        %375 = vmatpush1.bf16.msra.mxu0 0
        %376 = vmatprep.subr.bf16.mxu0 0
        %377 = vmatpush1.bf16.msra.mxu0 0
        %378 = vmatprep.subr.bf16.mxu0 0
        %379 = vmatpush1.bf16.msra.mxu0 0
        %380 = vmatprep.subr.bf16.mxu0 0
        %381 = vmatpush1.bf16.msra.mxu0 0
        %382 = vmatprep.subr.bf16.mxu0 0
        %383 = vmatpush1.bf16.msra.mxu0 0
        %384 = vmatprep.subr.bf16.mxu0 0
        %385 = vmatpush1.bf16.msra.mxu0 0
        %386 = vmatprep.subr.bf16.mxu0 0
        %387 = vmatpush1.bf16.msra.mxu0 0
        %388 = vmatprep.subr.bf16.mxu0 0
        %389 = vmatpush1.bf16.msra.mxu0 0
        %390 = vmatprep.subr.bf16.mxu0 0
        %391 = vmatpush1.bf16.msra.mxu0 0
        %392 = vmatprep.subr.bf16.mxu0 0
        %393 = vmatpush1.bf16.msra.mxu0 0
        %394 = vmatprep.mubr.bf16.mxu0 0
        %395 = vmatmul.mubr.bf16.gmra.mrb[0].mxu0 %v357
        %v396 = vpop.f32.mrb[0].mxu0
        %v397 = vadd.f32 0.0, %v396
        %v398 = vpop.f32.mrb[0].mxu0
        %v399 = vpop.f32.mrb[0].mxu0
        %v400 = vpop.f32.mrb[0].mxu0
        %401 = vdwg.mxu0
        %v402 = vadd.f32 %v347, %v397
        %s403 = scalar_lea.vmem %s1, 40
        %v404 = vld [vmem:[%s403] sm:$0xf]
        %v406 = vunpack.c.l.b16 %v353
        %v407 = vpack.c.b16 %v406, %v406
        %408 = vrot.lane.b32.xlu0 %v407, 120
        %v409 = vpop.permute.xlu0 %408
        %v411 = vsel %vm258, %v404, 0
        %v414 = vsel %vm262, %v409, 0
        %416 = vmatprep.subr.bf16.mxu0 0
        %417 = vmatpush1.bf16.msra.mxu0 %v414
        %418 = vmatprep.subr.bf16.mxu0 0
        %419 = vmatpush1.bf16.msra.mxu0 0
        %420 = vmatprep.subr.bf16.mxu0 0
        %421 = vmatpush1.bf16.msra.mxu0 0
        %422 = vmatprep.subr.bf16.mxu0 0
        %423 = vmatpush1.bf16.msra.mxu0 0
        %424 = vmatprep.subr.bf16.mxu0 0
        %425 = vmatpush1.bf16.msra.mxu0 0
        %426 = vmatprep.subr.bf16.mxu0 0
        %427 = vmatpush1.bf16.msra.mxu0 0
        %428 = vmatprep.subr.bf16.mxu0 0
        %429 = vmatpush1.bf16.msra.mxu0 0
        %430 = vmatprep.subr.bf16.mxu0 0
        %431 = vmatpush1.bf16.msra.mxu0 0
        %432 = vmatprep.subr.bf16.mxu0 0
        %433 = vmatpush1.bf16.msra.mxu0 0
        %434 = vmatprep.subr.bf16.mxu0 0
        %435 = vmatpush1.bf16.msra.mxu0 0
        %436 = vmatprep.subr.bf16.mxu0 0
        %437 = vmatpush1.bf16.msra.mxu0 0
        %438 = vmatprep.subr.bf16.mxu0 0
        %439 = vmatpush1.bf16.msra.mxu0 0
        %440 = vmatprep.subr.bf16.mxu0 0
        %441 = vmatpush1.bf16.msra.mxu0 0
        %442 = vmatprep.subr.bf16.mxu0 0
        %443 = vmatpush1.bf16.msra.mxu0 0
        %444 = vmatprep.subr.bf16.mxu0 0
        %445 = vmatpush1.bf16.msra.mxu0 0
        %446 = vmatprep.subr.bf16.mxu0 0
        %447 = vmatpush1.bf16.msra.mxu0 0
        %448 = vmatprep.mubr.bf16.mxu0 0
        %449 = vmatmul.mubr.bf16.gmra.mrb[0].mxu0 %v411
        %v450 = vpop.f32.mrb[0].mxu0
        %v451 = vadd.f32 0.0, %v450
        %v452 = vpop.f32.mrb[0].mxu0
        %v453 = vpop.f32.mrb[0].mxu0
        %v454 = vpop.f32.mrb[0].mxu0
        %455 = vdwg.mxu0
        %v456 = vadd.f32 %v402, %v451
        %s457 = scalar_lea.vmem %s234, 8
        %v458 = vld [vmem:[%s457] sm:$0xf]
        %s459 = scalar_lea.vmem %s1, 4
        %v460 = vld [vmem:[%s459] sm:$0xf]
        %v462 = vsel %vm258, %v460, 0
        %v465 = vsel %vm262, %v458, 0
        %467 = vmatprep.subr.bf16.mxu0 0
        %468 = vmatpush1.bf16.msra.mxu0 %v465
        %469 = vmatprep.subr.bf16.mxu0 0
        %470 = vmatpush1.bf16.msra.mxu0 0
        %471 = vmatprep.subr.bf16.mxu0 0
        %472 = vmatpush1.bf16.msra.mxu0 0
        %473 = vmatprep.subr.bf16.mxu0 0
        %474 = vmatpush1.bf16.msra.mxu0 0
        %475 = vmatprep.subr.bf16.mxu0 0
        %476 = vmatpush1.bf16.msra.mxu0 0
        %477 = vmatprep.subr.bf16.mxu0 0
        %478 = vmatpush1.bf16.msra.mxu0 0
        %479 = vmatprep.subr.bf16.mxu0 0
        %480 = vmatpush1.bf16.msra.mxu0 0
        %481 = vmatprep.subr.bf16.mxu0 0
        %482 = vmatpush1.bf16.msra.mxu0 0
        %483 = vmatprep.subr.bf16.mxu0 0
        %484 = vmatpush1.bf16.msra.mxu0 0
        %485 = vmatprep.subr.bf16.mxu0 0
        %486 = vmatpush1.bf16.msra.mxu0 0
        %487 = vmatprep.subr.bf16.mxu0 0
        %488 = vmatpush1.bf16.msra.mxu0 0
        %489 = vmatprep.subr.bf16.mxu0 0
        %490 = vmatpush1.bf16.msra.mxu0 0
        %491 = vmatprep.subr.bf16.mxu0 0
        %492 = vmatpush1.bf16.msra.mxu0 0
        %493 = vmatprep.subr.bf16.mxu0 0
        %494 = vmatpush1.bf16.msra.mxu0 0
        %495 = vmatprep.subr.bf16.mxu0 0
        %496 = vmatpush1.bf16.msra.mxu0 0
        %497 = vmatprep.subr.bf16.mxu0 0
        %498 = vmatpush1.bf16.msra.mxu0 0
        %499 = vmatprep.mubr.bf16.mxu0 0
        %500 = vmatmul.mubr.bf16.gmra.mrb[0].mxu0 %v462
        %v501 = vpop.f32.mrb[0].mxu0
        %v502 = vadd.f32 0.0, %v501
        %v503 = vpop.f32.mrb[0].mxu0
        %v504 = vpop.f32.mrb[0].mxu0
        %v505 = vpop.f32.mrb[0].mxu0
        %506 = vdwg.mxu0
        %v507 = vadd.f32 %v456, %v502
        %s508 = scalar_lea.vmem %s1, 36
        %v509 = vld [vmem:[%s508] sm:$0xf]
        %v511 = vunpack.c.l.b16 %v458
        %v512 = vpack.c.b16 %v511, %v511
        %513 = vrot.lane.b32.xlu0 %v512, 120
        %v514 = vpop.permute.xlu0 %513
        %v516 = vsel %vm258, %v509, 0
        %v519 = vsel %vm262, %v514, 0
        %521 = vmatprep.subr.bf16.mxu0 0
        %522 = vmatpush1.bf16.msra.mxu0 %v519
        %523 = vmatprep.subr.bf16.mxu0 0
        %524 = vmatpush1.bf16.msra.mxu0 0
        %525 = vmatprep.subr.bf16.mxu0 0
        %526 = vmatpush1.bf16.msra.mxu0 0
        %527 = vmatprep.subr.bf16.mxu0 0
        %528 = vmatpush1.bf16.msra.mxu0 0
        %529 = vmatprep.subr.bf16.mxu0 0
        %530 = vmatpush1.bf16.msra.mxu0 0
        %531 = vmatprep.subr.bf16.mxu0 0
        %532 = vmatpush1.bf16.msra.mxu0 0
        %533 = vmatprep.subr.bf16.mxu0 0
        %534 = vmatpush1.bf16.msra.mxu0 0
        %535 = vmatprep.subr.bf16.mxu0 0
        %536 = vmatpush1.bf16.msra.mxu0 0
        %537 = vmatprep.subr.bf16.mxu0 0
        %538 = vmatpush1.bf16.msra.mxu0 0
        %539 = vmatprep.subr.bf16.mxu0 0
        %540 = vmatpush1.bf16.msra.mxu0 0
        %541 = vmatprep.subr.bf16.mxu0 0
        %542 = vmatpush1.bf16.msra.mxu0 0
        %543 = vmatprep.subr.bf16.mxu0 0
        %544 = vmatpush1.bf16.msra.mxu0 0
        %545 = vmatprep.subr.bf16.mxu0 0
        %546 = vmatpush1.bf16.msra.mxu0 0
        %547 = vmatprep.subr.bf16.mxu0 0
        %548 = vmatpush1.bf16.msra.mxu0 0
        %549 = vmatprep.subr.bf16.mxu0 0
        %550 = vmatpush1.bf16.msra.mxu0 0
        %551 = vmatprep.subr.bf16.mxu0 0
        %552 = vmatpush1.bf16.msra.mxu0 0
        %553 = vmatprep.mubr.bf16.mxu0 0
        %554 = vmatmul.mubr.bf16.gmra.mrb[0].mxu0 %v516
        %v555 = vpop.f32.mrb[0].mxu0
        %v556 = vadd.f32 0.0, %v555
        %v557 = vpop.f32.mrb[0].mxu0
        %v558 = vpop.f32.mrb[0].mxu0
        %v559 = vpop.f32.mrb[0].mxu0
        %560 = vdwg.mxu0
        %v561 = vadd.f32 %v507, %v556
        %s562 = scalar_lea.vmem %s234, 12
        %v563 = vld [vmem:[%s562] sm:$0xf]
        %s564 = scalar_lea.vmem %s1, 12
        %v565 = vld [vmem:[%s564] sm:$0xf]
        %v567 = vsel %vm258, %v565, 0
        %v570 = vsel %vm262, %v563, 0
        %572 = vmatprep.subr.bf16.mxu0 0
        %573 = vmatpush1.bf16.msra.mxu0 %v570
        %574 = vmatprep.subr.bf16.mxu0 0
        %575 = vmatpush1.bf16.msra.mxu0 0
        %576 = vmatprep.subr.bf16.mxu0 0
        %577 = vmatpush1.bf16.msra.mxu0 0
        %578 = vmatprep.subr.bf16.mxu0 0
        %579 = vmatpush1.bf16.msra.mxu0 0
        %580 = vmatprep.subr.bf16.mxu0 0
        %581 = vmatpush1.bf16.msra.mxu0 0
        %582 = vmatprep.subr.bf16.mxu0 0
        %583 = vmatpush1.bf16.msra.mxu0 0
        %584 = vmatprep.subr.bf16.mxu0 0
        %585 = vmatpush1.bf16.msra.mxu0 0
        %586 = vmatprep.subr.bf16.mxu0 0
        %587 = vmatpush1.bf16.msra.mxu0 0
        %588 = vmatprep.subr.bf16.mxu0 0
        %589 = vmatpush1.bf16.msra.mxu0 0
        %590 = vmatprep.subr.bf16.mxu0 0
        %591 = vmatpush1.bf16.msra.mxu0 0
        %592 = vmatprep.subr.bf16.mxu0 0
        %593 = vmatpush1.bf16.msra.mxu0 0
        %594 = vmatprep.subr.bf16.mxu0 0
        %595 = vmatpush1.bf16.msra.mxu0 0
        %596 = vmatprep.subr.bf16.mxu0 0
        %597 = vmatpush1.bf16.msra.mxu0 0
        %598 = vmatprep.subr.bf16.mxu0 0
        %599 = vmatpush1.bf16.msra.mxu0 0
        %600 = vmatprep.subr.bf16.mxu0 0
        %601 = vmatpush1.bf16.msra.mxu0 0
        %602 = vmatprep.subr.bf16.mxu0 0
        %603 = vmatpush1.bf16.msra.mxu0 0
        %604 = vmatprep.mubr.bf16.mxu0 0
        %605 = vmatmul.mubr.bf16.gmra.mrb[0].mxu0 %v567
        %v606 = vpop.f32.mrb[0].mxu0
        %v607 = vadd.f32 0.0, %v606
        %v608 = vpop.f32.mrb[0].mxu0
        %v609 = vpop.f32.mrb[0].mxu0
        %v610 = vpop.f32.mrb[0].mxu0
        %611 = vdwg.mxu0
        %v612 = vadd.f32 %v561, %v607
        %s613 = scalar_lea.vmem %s1, 44
        %v614 = vld [vmem:[%s613] sm:$0xf]
        %v616 = vunpack.c.l.b16 %v563
        %v617 = vpack.c.b16 %v616, %v616
        %618 = vrot.lane.b32.xlu0 %v617, 120
        %v619 = vpop.permute.xlu0 %618
        %v621 = vsel %vm258, %v614, 0
        %v624 = vsel %vm262, %v619, 0
        %626 = vmatprep.subr.bf16.mxu0 0
        %627 = vmatpush1.bf16.msra.mxu0 %v624
        %628 = vmatprep.subr.bf16.mxu0 0
        %629 = vmatpush1.bf16.msra.mxu0 0
        %630 = vmatprep.subr.bf16.mxu0 0
        %631 = vmatpush1.bf16.msra.mxu0 0
        %632 = vmatprep.subr.bf16.mxu0 0
        %633 = vmatpush1.bf16.msra.mxu0 0
        %634 = vmatprep.subr.bf16.mxu0 0
        %635 = vmatpush1.bf16.msra.mxu0 0
        %636 = vmatprep.subr.bf16.mxu0 0
        %637 = vmatpush1.bf16.msra.mxu0 0
        %638 = vmatprep.subr.bf16.mxu0 0
        %639 = vmatpush1.bf16.msra.mxu0 0
        %640 = vmatprep.subr.bf16.mxu0 0
        %641 = vmatpush1.bf16.msra.mxu0 0
        %642 = vmatprep.subr.bf16.mxu0 0
        %643 = vmatpush1.bf16.msra.mxu0 0
        %644 = vmatprep.subr.bf16.mxu0 0
        %645 = vmatpush1.bf16.msra.mxu0 0
        %646 = vmatprep.subr.bf16.mxu0 0
        %647 = vmatpush1.bf16.msra.mxu0 0
        %648 = vmatprep.subr.bf16.mxu0 0
        %649 = vmatpush1.bf16.msra.mxu0 0
        %650 = vmatprep.subr.bf16.mxu0 0
        %651 = vmatpush1.bf16.msra.mxu0 0
        %652 = vmatprep.subr.bf16.mxu0 0
        %653 = vmatpush1.bf16.msra.mxu0 0
        %654 = vmatprep.subr.bf16.mxu0 0
        %655 = vmatpush1.bf16.msra.mxu0 0
        %656 = vmatprep.subr.bf16.mxu0 0
        %657 = vmatpush1.bf16.msra.mxu0 0
        %658 = vmatprep.mubr.bf16.mxu0 0
        %659 = vmatmul.mubr.bf16.gmra.mrb[0].mxu0 %v621
        %v660 = vpop.f32.mrb[0].mxu0
        %v661 = vadd.f32 0.0, %v660
        %v662 = vpop.f32.mrb[0].mxu0
        %v663 = vpop.f32.mrb[0].mxu0
        %v664 = vpop.f32.mrb[0].mxu0
        %665 = vdwg.mxu0
        %v666 = vadd.f32 %v612, %v661
        %s667 = scalar_lea.vmem %s234, 16
        %v668 = vld [vmem:[%s667] sm:$0xf]
        %s669 = scalar_lea.vmem %s1, 16
        %v670 = vld [vmem:[%s669] sm:$0xf]
        %v672 = vsel %vm258, %v670, 0
        %v675 = vsel %vm262, %v668, 0
        %677 = vmatprep.subr.bf16.mxu0 0
        %678 = vmatpush1.bf16.msra.mxu0 %v675
        %679 = vmatprep.subr.bf16.mxu0 0
        %680 = vmatpush1.bf16.msra.mxu0 0
        %681 = vmatprep.subr.bf16.mxu0 0
        %682 = vmatpush1.bf16.msra.mxu0 0
        %683 = vmatprep.subr.bf16.mxu0 0
        %684 = vmatpush1.bf16.msra.mxu0 0
        %685 = vmatprep.subr.bf16.mxu0 0
        %686 = vmatpush1.bf16.msra.mxu0 0
        %687 = vmatprep.subr.bf16.mxu0 0
        %688 = vmatpush1.bf16.msra.mxu0 0
        %689 = vmatprep.subr.bf16.mxu0 0
        %690 = vmatpush1.bf16.msra.mxu0 0
        %691 = vmatprep.subr.bf16.mxu0 0
        %692 = vmatpush1.bf16.msra.mxu0 0
        %693 = vmatprep.subr.bf16.mxu0 0
        %694 = vmatpush1.bf16.msra.mxu0 0
        %695 = vmatprep.subr.bf16.mxu0 0
        %696 = vmatpush1.bf16.msra.mxu0 0
        %697 = vmatprep.subr.bf16.mxu0 0
        %698 = vmatpush1.bf16.msra.mxu0 0
        %699 = vmatprep.subr.bf16.mxu0 0
        %700 = vmatpush1.bf16.msra.mxu0 0
        %701 = vmatprep.subr.bf16.mxu0 0
        %702 = vmatpush1.bf16.msra.mxu0 0
        %703 = vmatprep.subr.bf16.mxu0 0
        %704 = vmatpush1.bf16.msra.mxu0 0
        %705 = vmatprep.subr.bf16.mxu0 0
        %706 = vmatpush1.bf16.msra.mxu0 0
        %707 = vmatprep.subr.bf16.mxu0 0
        %708 = vmatpush1.bf16.msra.mxu0 0
        %709 = vmatprep.mubr.bf16.mxu0 0
        %710 = vmatmul.mubr.bf16.gmra.mrb[0].mxu0 %v672
        %v711 = vpop.f32.mrb[0].mxu0
        %v712 = vadd.f32 0.0, %v711
        %v713 = vpop.f32.mrb[0].mxu0
        %v714 = vpop.f32.mrb[0].mxu0
        %v715 = vpop.f32.mrb[0].mxu0
        %716 = vdwg.mxu0
        %v717 = vadd.f32 %v666, %v712
        %s718 = scalar_lea.vmem %s1, 48
        %v719 = vld [vmem:[%s718] sm:$0xf]
        %v721 = vunpack.c.l.b16 %v668
        %v722 = vpack.c.b16 %v721, %v721
        %723 = vrot.lane.b32.xlu0 %v722, 120
        %v724 = vpop.permute.xlu0 %723
        %v726 = vsel %vm258, %v719, 0
        %v729 = vsel %vm262, %v724, 0
        %731 = vmatprep.subr.bf16.mxu0 0
        %732 = vmatpush1.bf16.msra.mxu0 %v729
        %733 = vmatprep.subr.bf16.mxu0 0
        %734 = vmatpush1.bf16.msra.mxu0 0
        %735 = vmatprep.subr.bf16.mxu0 0
        %736 = vmatpush1.bf16.msra.mxu0 0
        %737 = vmatprep.subr.bf16.mxu0 0
        %738 = vmatpush1.bf16.msra.mxu0 0
        %739 = vmatprep.subr.bf16.mxu0 0
        %740 = vmatpush1.bf16.msra.mxu0 0
        %741 = vmatprep.subr.bf16.mxu0 0
        %742 = vmatpush1.bf16.msra.mxu0 0
        %743 = vmatprep.subr.bf16.mxu0 0
        %744 = vmatpush1.bf16.msra.mxu0 0
        %745 = vmatprep.subr.bf16.mxu0 0
        %746 = vmatpush1.bf16.msra.mxu0 0
        %747 = vmatprep.subr.bf16.mxu0 0
        %748 = vmatpush1.bf16.msra.mxu0 0
        %749 = vmatprep.subr.bf16.mxu0 0
        %750 = vmatpush1.bf16.msra.mxu0 0
        %751 = vmatprep.subr.bf16.mxu0 0
        %752 = vmatpush1.bf16.msra.mxu0 0
        %753 = vmatprep.subr.bf16.mxu0 0
        %754 = vmatpush1.bf16.msra.mxu0 0
        %755 = vmatprep.subr.bf16.mxu0 0
        %756 = vmatpush1.bf16.msra.mxu0 0
        %757 = vmatprep.subr.bf16.mxu0 0
        %758 = vmatpush1.bf16.msra.mxu0 0
        %759 = vmatprep.subr.bf16.mxu0 0
        %760 = vmatpush1.bf16.msra.mxu0 0
        %761 = vmatprep.subr.bf16.mxu0 0
        %762 = vmatpush1.bf16.msra.mxu0 0
        %763 = vmatprep.mubr.bf16.mxu0 0
        %764 = vmatmul.mubr.bf16.gmra.mrb[0].mxu0 %v726
        %v765 = vpop.f32.mrb[0].mxu0
        %v766 = vadd.f32 0.0, %v765
        %v767 = vpop.f32.mrb[0].mxu0
        %v768 = vpop.f32.mrb[0].mxu0
        %v769 = vpop.f32.mrb[0].mxu0
        %770 = vdwg.mxu0
        %v771 = vadd.f32 %v717, %v766
        %s772 = scalar_lea.vmem %s234, 20
        %v773 = vld [vmem:[%s772] sm:$0xf]
        %s774 = scalar_lea.vmem %s1, 24
        %v775 = vld [vmem:[%s774] sm:$0xf]
        %v777 = vsel %vm258, %v775, 0
        %v780 = vsel %vm262, %v773, 0
        %782 = vmatprep.subr.bf16.mxu0 0
        %783 = vmatpush1.bf16.msra.mxu0 %v780
        %784 = vmatprep.subr.bf16.mxu0 0
        %785 = vmatpush1.bf16.msra.mxu0 0
        %786 = vmatprep.subr.bf16.mxu0 0
        %787 = vmatpush1.bf16.msra.mxu0 0
        %788 = vmatprep.subr.bf16.mxu0 0
        %789 = vmatpush1.bf16.msra.mxu0 0
        %790 = vmatprep.subr.bf16.mxu0 0
        %791 = vmatpush1.bf16.msra.mxu0 0
        %792 = vmatprep.subr.bf16.mxu0 0
        %793 = vmatpush1.bf16.msra.mxu0 0
        %794 = vmatprep.subr.bf16.mxu0 0
        %795 = vmatpush1.bf16.msra.mxu0 0
        %796 = vmatprep.subr.bf16.mxu0 0
        %797 = vmatpush1.bf16.msra.mxu0 0
        %798 = vmatprep.subr.bf16.mxu0 0
        %799 = vmatpush1.bf16.msra.mxu0 0
        %800 = vmatprep.subr.bf16.mxu0 0
        %801 = vmatpush1.bf16.msra.mxu0 0
        %802 = vmatprep.subr.bf16.mxu0 0
        %803 = vmatpush1.bf16.msra.mxu0 0
        %804 = vmatprep.subr.bf16.mxu0 0
        %805 = vmatpush1.bf16.msra.mxu0 0
        %806 = vmatprep.subr.bf16.mxu0 0
        %807 = vmatpush1.bf16.msra.mxu0 0
        %808 = vmatprep.subr.bf16.mxu0 0
        %809 = vmatpush1.bf16.msra.mxu0 0
        %810 = vmatprep.subr.bf16.mxu0 0
        %811 = vmatpush1.bf16.msra.mxu0 0
        %812 = vmatprep.subr.bf16.mxu0 0
        %813 = vmatpush1.bf16.msra.mxu0 0
        %814 = vmatprep.mubr.bf16.mxu0 0
        %815 = vmatmul.mubr.bf16.gmra.mrb[0].mxu0 %v777
        %v816 = vpop.f32.mrb[0].mxu0
        %v817 = vadd.f32 0.0, %v816
        %v818 = vpop.f32.mrb[0].mxu0
        %v819 = vpop.f32.mrb[0].mxu0
        %v820 = vpop.f32.mrb[0].mxu0
        %821 = vdwg.mxu0
        %v822 = vadd.f32 %v771, %v817
        %s823 = scalar_lea.vmem %s1, 56
        %v824 = vld [vmem:[%s823] sm:$0xf]
        %v826 = vunpack.c.l.b16 %v773
        %v827 = vpack.c.b16 %v826, %v826
        %828 = vrot.lane.b32.xlu0 %v827, 120
        %v829 = vpop.permute.xlu0 %828
        %v831 = vsel %vm258, %v824, 0
        %v834 = vsel %vm262, %v829, 0
        %836 = vmatprep.subr.bf16.mxu0 0
        %837 = vmatpush1.bf16.msra.mxu0 %v834
        %838 = vmatprep.subr.bf16.mxu0 0
        %839 = vmatpush1.bf16.msra.mxu0 0
        %840 = vmatprep.subr.bf16.mxu0 0
        %841 = vmatpush1.bf16.msra.mxu0 0
        %842 = vmatprep.subr.bf16.mxu0 0
        %843 = vmatpush1.bf16.msra.mxu0 0
        %844 = vmatprep.subr.bf16.mxu0 0
        %845 = vmatpush1.bf16.msra.mxu0 0
        %846 = vmatprep.subr.bf16.mxu0 0
        %847 = vmatpush1.bf16.msra.mxu0 0
        %848 = vmatprep.subr.bf16.mxu0 0
        %849 = vmatpush1.bf16.msra.mxu0 0
        %850 = vmatprep.subr.bf16.mxu0 0
        %851 = vmatpush1.bf16.msra.mxu0 0
        %852 = vmatprep.subr.bf16.mxu0 0
        %853 = vmatpush1.bf16.msra.mxu0 0
        %854 = vmatprep.subr.bf16.mxu0 0
        %855 = vmatpush1.bf16.msra.mxu0 0
        %856 = vmatprep.subr.bf16.mxu0 0
        %857 = vmatpush1.bf16.msra.mxu0 0
        %858 = vmatprep.subr.bf16.mxu0 0
        %859 = vmatpush1.bf16.msra.mxu0 0
        %860 = vmatprep.subr.bf16.mxu0 0
        %861 = vmatpush1.bf16.msra.mxu0 0
        %862 = vmatprep.subr.bf16.mxu0 0
        %863 = vmatpush1.bf16.msra.mxu0 0
        %864 = vmatprep.subr.bf16.mxu0 0
        %865 = vmatpush1.bf16.msra.mxu0 0
        %866 = vmatprep.subr.bf16.mxu0 0
        %867 = vmatpush1.bf16.msra.mxu0 0
        %868 = vmatprep.mubr.bf16.mxu0 0
        %869 = vmatmul.mubr.bf16.gmra.mrb[0].mxu0 %v831
        %v870 = vpop.f32.mrb[0].mxu0
        %v871 = vadd.f32 0.0, %v870
        %v872 = vpop.f32.mrb[0].mxu0
        %v873 = vpop.f32.mrb[0].mxu0
        %v874 = vpop.f32.mrb[0].mxu0
        %875 = vdwg.mxu0
        %v876 = vadd.f32 %v822, %v871
        %s877 = scalar_lea.vmem %s234, 24
        %v878 = vld [vmem:[%s877] sm:$0xf]
        %s879 = scalar_lea.vmem %s1, 20
        %v880 = vld [vmem:[%s879] sm:$0xf]
        %v882 = vsel %vm258, %v880, 0
        %v885 = vsel %vm262, %v878, 0
        %887 = vmatprep.subr.bf16.mxu0 0
        %888 = vmatpush1.bf16.msra.mxu0 %v885
        %889 = vmatprep.subr.bf16.mxu0 0
        %890 = vmatpush1.bf16.msra.mxu0 0
        %891 = vmatprep.subr.bf16.mxu0 0
        %892 = vmatpush1.bf16.msra.mxu0 0
        %893 = vmatprep.subr.bf16.mxu0 0
        %894 = vmatpush1.bf16.msra.mxu0 0
        %895 = vmatprep.subr.bf16.mxu0 0
        %896 = vmatpush1.bf16.msra.mxu0 0
        %897 = vmatprep.subr.bf16.mxu0 0
        %898 = vmatpush1.bf16.msra.mxu0 0
        %899 = vmatprep.subr.bf16.mxu0 0
        %900 = vmatpush1.bf16.msra.mxu0 0
        %901 = vmatprep.subr.bf16.mxu0 0
        %902 = vmatpush1.bf16.msra.mxu0 0
        %903 = vmatprep.subr.bf16.mxu0 0
        %904 = vmatpush1.bf16.msra.mxu0 0
        %905 = vmatprep.subr.bf16.mxu0 0
        %906 = vmatpush1.bf16.msra.mxu0 0
        %907 = vmatprep.subr.bf16.mxu0 0
        %908 = vmatpush1.bf16.msra.mxu0 0
        %909 = vmatprep.subr.bf16.mxu0 0
        %910 = vmatpush1.bf16.msra.mxu0 0
        %911 = vmatprep.subr.bf16.mxu0 0
        %912 = vmatpush1.bf16.msra.mxu0 0
        %913 = vmatprep.subr.bf16.mxu0 0
        %914 = vmatpush1.bf16.msra.mxu0 0
        %915 = vmatprep.subr.bf16.mxu0 0
        %916 = vmatpush1.bf16.msra.mxu0 0
        %917 = vmatprep.subr.bf16.mxu0 0
        %918 = vmatpush1.bf16.msra.mxu0 0
        %919 = vmatprep.mubr.bf16.mxu0 0
        %920 = vmatmul.mubr.bf16.gmra.mrb[0].mxu0 %v882
        %v921 = vpop.f32.mrb[0].mxu0
        %v922 = vadd.f32 0.0, %v921
        %v923 = vpop.f32.mrb[0].mxu0
        %v924 = vpop.f32.mrb[0].mxu0
        %v925 = vpop.f32.mrb[0].mxu0
        %926 = vdwg.mxu0
        %v927 = vadd.f32 %v876, %v922
        %s928 = scalar_lea.vmem %s1, 52
        %v929 = vld [vmem:[%s928] sm:$0xf]
        %v931 = vunpack.c.l.b16 %v878
        %v932 = vpack.c.b16 %v931, %v931
        %933 = vrot.lane.b32.xlu0 %v932, 120
        %v934 = vpop.permute.xlu0 %933
        %v936 = vsel %vm258, %v929, 0
        %v939 = vsel %vm262, %v934, 0
        %941 = vmatprep.subr.bf16.mxu0 0
        %942 = vmatpush1.bf16.msra.mxu0 %v939
        %943 = vmatprep.subr.bf16.mxu0 0
        %944 = vmatpush1.bf16.msra.mxu0 0
        %945 = vmatprep.subr.bf16.mxu0 0
        %946 = vmatpush1.bf16.msra.mxu0 0
        %947 = vmatprep.subr.bf16.mxu0 0
        %948 = vmatpush1.bf16.msra.mxu0 0
        %949 = vmatprep.subr.bf16.mxu0 0
        %950 = vmatpush1.bf16.msra.mxu0 0
        %951 = vmatprep.subr.bf16.mxu0 0
        %952 = vmatpush1.bf16.msra.mxu0 0
        %953 = vmatprep.subr.bf16.mxu0 0
        %954 = vmatpush1.bf16.msra.mxu0 0
        %955 = vmatprep.subr.bf16.mxu0 0
        %956 = vmatpush1.bf16.msra.mxu0 0
        %957 = vmatprep.subr.bf16.mxu0 0
        %958 = vmatpush1.bf16.msra.mxu0 0
        %959 = vmatprep.subr.bf16.mxu0 0
        %960 = vmatpush1.bf16.msra.mxu0 0
        %961 = vmatprep.subr.bf16.mxu0 0
        %962 = vmatpush1.bf16.msra.mxu0 0
        %963 = vmatprep.subr.bf16.mxu0 0
        %964 = vmatpush1.bf16.msra.mxu0 0
        %965 = vmatprep.subr.bf16.mxu0 0
        %966 = vmatpush1.bf16.msra.mxu0 0
        %967 = vmatprep.subr.bf16.mxu0 0
        %968 = vmatpush1.bf16.msra.mxu0 0
        %969 = vmatprep.subr.bf16.mxu0 0
        %970 = vmatpush1.bf16.msra.mxu0 0
        %971 = vmatprep.subr.bf16.mxu0 0
        %972 = vmatpush1.bf16.msra.mxu0 0
        %973 = vmatprep.mubr.bf16.mxu0 0
        %974 = vmatmul.mubr.bf16.gmra.mrb[0].mxu0 %v936
        %v975 = vpop.f32.mrb[0].mxu0
        %v976 = vadd.f32 0.0, %v975
        %v977 = vpop.f32.mrb[0].mxu0
        %v978 = vpop.f32.mrb[0].mxu0
        %v979 = vpop.f32.mrb[0].mxu0
        %980 = vdwg.mxu0
        %v981 = vadd.f32 %v927, %v976
        %s982 = scalar_lea.vmem %s234, 28
        %v983 = vld [vmem:[%s982] sm:$0xf]
        %s984 = scalar_lea.vmem %s1, 28
        %v985 = vld [vmem:[%s984] sm:$0xf]
        %v987 = vsel %vm258, %v985, 0
        %v990 = vsel %vm262, %v983, 0
        %992 = vmatprep.subr.bf16.mxu0 0
        %993 = vmatpush1.bf16.msra.mxu0 %v990
        %994 = vmatprep.subr.bf16.mxu0 0
        %995 = vmatpush1.bf16.msra.mxu0 0
        %996 = vmatprep.subr.bf16.mxu0 0
        %997 = vmatpush1.bf16.msra.mxu0 0
        %998 = vmatprep.subr.bf16.mxu0 0
        %999 = vmatpush1.bf16.msra.mxu0 0
        %1000 = vmatprep.subr.bf16.mxu0 0
        %1001 = vmatpush1.bf16.msra.mxu0 0
        %1002 = vmatprep.subr.bf16.mxu0 0
        %1003 = vmatpush1.bf16.msra.mxu0 0
        %1004 = vmatprep.subr.bf16.mxu0 0
        %1005 = vmatpush1.bf16.msra.mxu0 0
        %1006 = vmatprep.subr.bf16.mxu0 0
        %1007 = vmatpush1.bf16.msra.mxu0 0
        %1008 = vmatprep.subr.bf16.mxu0 0
        %1009 = vmatpush1.bf16.msra.mxu0 0
        %1010 = vmatprep.subr.bf16.mxu0 0
        %1011 = vmatpush1.bf16.msra.mxu0 0
        %1012 = vmatprep.subr.bf16.mxu0 0
        %1013 = vmatpush1.bf16.msra.mxu0 0
        %1014 = vmatprep.subr.bf16.mxu0 0
        %1015 = vmatpush1.bf16.msra.mxu0 0
        %1016 = vmatprep.subr.bf16.mxu0 0
        %1017 = vmatpush1.bf16.msra.mxu0 0
        %1018 = vmatprep.subr.bf16.mxu0 0
        %1019 = vmatpush1.bf16.msra.mxu0 0
        %1020 = vmatprep.subr.bf16.mxu0 0
        %1021 = vmatpush1.bf16.msra.mxu0 0
        %1022 = vmatprep.subr.bf16.mxu0 0
        %1023 = vmatpush1.bf16.msra.mxu0 0
        %1024 = vmatprep.mubr.bf16.mxu0 0
        %1025 = vmatmul.mubr.bf16.gmra.mrb[0].mxu0 %v987
        %v1026 = vpop.f32.mrb[0].mxu0
        %v1027 = vadd.f32 0.0, %v1026
        %v1028 = vpop.f32.mrb[0].mxu0
        %v1029 = vpop.f32.mrb[0].mxu0
        %v1030 = vpop.f32.mrb[0].mxu0
        %1031 = vdwg.mxu0
        %v1032 = vadd.f32 %v981, %v1027
        %s1033 = scalar_lea.vmem %s1, 60
        %v1034 = vld [vmem:[%s1033] sm:$0xf]
        %v1036 = vunpack.c.l.b16 %v983
        %v1037 = vpack.c.b16 %v1036, %v1036
        %1038 = vrot.lane.b32.xlu0 %v1037, 120
        %v1039 = vpop.permute.xlu0 %1038
        %v1041 = vsel %vm258, %v1034, 0
        %v1044 = vsel %vm262, %v1039, 0
        %1046 = vmatprep.subr.bf16.mxu0 0
        %1047 = vmatpush1.bf16.msra.mxu0 %v1044
        %1048 = vmatprep.subr.bf16.mxu0 0
        %1049 = vmatpush1.bf16.msra.mxu0 0
        %1050 = vmatprep.subr.bf16.mxu0 0
        %1051 = vmatpush1.bf16.msra.mxu0 0
        %1052 = vmatprep.subr.bf16.mxu0 0
        %1053 = vmatpush1.bf16.msra.mxu0 0
        %1054 = vmatprep.subr.bf16.mxu0 0
        %1055 = vmatpush1.bf16.msra.mxu0 0
        %1056 = vmatprep.subr.bf16.mxu0 0
        %1057 = vmatpush1.bf16.msra.mxu0 0
        %1058 = vmatprep.subr.bf16.mxu0 0
        %1059 = vmatpush1.bf16.msra.mxu0 0
        %1060 = vmatprep.subr.bf16.mxu0 0
        %1061 = vmatpush1.bf16.msra.mxu0 0
        %1062 = vmatprep.subr.bf16.mxu0 0
        %1063 = vmatpush1.bf16.msra.mxu0 0
        %1064 = vmatprep.subr.bf16.mxu0 0
        %1065 = vmatpush1.bf16.msra.mxu0 0
        %1066 = vmatprep.subr.bf16.mxu0 0
        %1067 = vmatpush1.bf16.msra.mxu0 0
        %1068 = vmatprep.subr.bf16.mxu0 0
        %1069 = vmatpush1.bf16.msra.mxu0 0
        %1070 = vmatprep.subr.bf16.mxu0 0
        %1071 = vmatpush1.bf16.msra.mxu0 0
        %1072 = vmatprep.subr.bf16.mxu0 0
        %1073 = vmatpush1.bf16.msra.mxu0 0
        %1074 = vmatprep.subr.bf16.mxu0 0
        %1075 = vmatpush1.bf16.msra.mxu0 0
        %1076 = vmatprep.subr.bf16.mxu0 0
        %1077 = vmatpush1.bf16.msra.mxu0 0
        %1078 = vmatprep.mubr.bf16.mxu0 0
        %1079 = vmatmul.mubr.bf16.gmra.mrb[0].mxu0 %v1041
        %v1080 = vpop.f32.mrb[0].mxu0
        %v1081 = vadd.f32 0.0, %v1080
        %v1082 = vpop.f32.mrb[0].mxu0
        %v1083 = vpop.f32.mrb[0].mxu0
        %v1084 = vpop.f32.mrb[0].mxu0
        %1085 = vdwg.mxu0
        %v1086 = vadd.f32 %v1032, %v1081
        %v1087 = vpack.c.bf16 %v1086, %v1086
        %vm1088 = vcmask 519168
        %1089 = vst.msk [vmem:[%s214] sm:$0xf] %vm1088, %v1087
        %vm1090 = vcmask 523264
        %v1091 = vsel %vm1090, %v1086, 0.0
        %1092 = vadd.xlane.f32.xlu0 %v1091
        %v1093 = vpop.xlane.xlu0 %1092
        %v1094 = vmul.f32 %v1093, 0.015625
        %v1095 = vsub.f32 %v1086, %v1094
        %v1096 = vmul.f32 %v1095, %v1095
        %v1097 = vsel %vm1090, %v1096, 0.0
        %1098 = vadd.xlane.f32.xlu0 %v1097
        %v1099 = vpop.xlane.xlu0 %1098
        %vm1100 = vcmask 7168
        %1101 = vst.msk [vmem:[%s240] sm:$0xff] %vm1100, %v1093
        %1102 = vst.msk [vmem:[%s246] sm:$0xff] %vm1100, %v1099
        %s1103 = sand.u32 %s90, 1
        %s1104 = scalar_lea.sflag [#allocation3], %s1103
        %s1105 = sand.u32 %s90, 1
        %s1106 = smul.addr %s1105, 4
        %s1107 = scalar_lea.vmem [#allocation2], %s1106
        %s1108 = sadd.s32 %s23, %s24
        %p1109 = scmp.lt.s32.totalorder %s1108, 1
        %s1110 = scalar_select %p1109, %s1108, 1
        %s1111 = smul.addr %s1110, 8
        %s1112 = scalar_lea.vmem %s3, %s1111
        %s1113 = sadd.s32 %s23, %s24
        %p1114 = scmp.lt.s32.totalorder %s1113, 1
        %s1115 = scalar_select %p1114, %s1113, 1
        %s1116 = smul.addr %s1115, 8
        %s1117 = scalar_lea.vmem %s4, %s1116
        // Predicated region
        $region29: #{tpu_custom_call.1} parent=27 // pred_check
          %p1118 = pneg %p100
        $region30: #{tpu_custom_call.1} parent=27 // pred_check_branch
          %1120 = sbr.rel (%p1118) target = $region32
        $region31: #{tpu_custom_call.1} parent=27 // pred_region
          %s1122 = ssub.s32 64, 64
          %1123 = vsyncadd %s1104, %s1122
          %s1124 = sadd.s32 %s24, %s23
          %s1125 = smul.addr %s1124, 64
          %s1126 = scalar_lea.hbm %s2, %s1125
          %s1128 = sshll.u32 %s1107, 4
          %s1129 = int_to_ptr.vmem [resolvable:$true] %s1128
          %1131 = dma.vmem_to_hbm [thread:$0]  %s1129, 64, %s1126, %s1104
        $region32: #{tpu_custom_call.1} parent=27 // pred_fallthru
          _
        // Predicated region
        $region33: #{tpu_custom_call.1} parent=27 // pred_check
          %p1132 = pneg %p128
        $region34: #{tpu_custom_call.1} parent=27 // pred_check_branch
          %1134 = sbr.rel (%p1132) target = $region36
        $region35: #{tpu_custom_call.1} parent=27 // pred_region
          %s1135 = sadd.s32 %s23, %s24
        $region36: #{tpu_custom_call.1} parent=27 // pred_fallthru
          _
        // Predicated region
        $region37: #{tpu_custom_call.1} parent=27 // pred_check
          %p1136 = pneg %p156
        $region38: #{tpu_custom_call.1} parent=27 // pred_check_branch
          %1138 = sbr.rel (%p1136) target = $region40
        $region39: #{tpu_custom_call.1} parent=27 // pred_region
          %s1139 = sadd.s32 %s23, %s24
        $region40: #{tpu_custom_call.1} parent=27 // pred_fallthru
          _
      $region28: #{tpu_custom_call.1} parent=5 // pred_fallthru
        _
      %p1140 = scmp.le.s32.totalorder 2, %s14
      // Predicated region
      $region41: #{tpu_custom_call.1} parent=5 // pred_check
        %p1141 = pneg %p1140
      $region42: #{tpu_custom_call.1} parent=5 // pred_check_branch
        %1143 = sbr.rel (%p1141) target = $region44
      $region43: #{tpu_custom_call.1} parent=5 // pred_region
        %s1144 = ssub.s32 %s14, 2
        // Predicated region
        $region45: #{tpu_custom_call.1} parent=43 // pred_check
          %p1145 = pneg %p106
        $region46: #{tpu_custom_call.1} parent=43 // pred_check_branch
          %1147 = sbr.rel (%p1145) target = $region48
        $region47: #{tpu_custom_call.1} parent=43 // pred_region
          %s1148 = sand.u32 %s91, 1
          %s1149 = scalar_lea.sflag [#allocation3], %s1148
          %s1150 = sand.u32 %s91, 1
          %s1151 = smul.addr %s1150, 4
          %s1152 = scalar_lea.vmem [#allocation2], %s1151
          %1153 = dma.done %s1149, 64
        $region48: #{tpu_custom_call.1} parent=43 // pred_fallthru
          _
        // Predicated region
        $region49: #{tpu_custom_call.1} parent=43 // pred_check
          %p1154 = pneg %p134
        $region50: #{tpu_custom_call.1} parent=43 // pred_check_branch
          %1156 = sbr.rel (%p1154) target = $region52
        $region51: #{tpu_custom_call.1} parent=43 // pred_region
          %s1157 = sadd.s32 %s25, %s26
          %p1158 = scmp.lt.s32.totalorder %s1157, 1
          %s1159 = scalar_select %p1158, %s1157, 1
          %s1160 = smul.addr %s1159, 8
          %s1161 = scalar_lea.vmem %s3, %s1160
        $region52: #{tpu_custom_call.1} parent=43 // pred_fallthru
          _
        // Predicated region
        $region53: #{tpu_custom_call.1} parent=43 // pred_check
          %p1162 = pneg %p162
        $region54: #{tpu_custom_call.1} parent=43 // pred_check_branch
          %1164 = sbr.rel (%p1162) target = $region56
        $region55: #{tpu_custom_call.1} parent=43 // pred_region
          %s1165 = sadd.s32 %s25, %s26
          %p1166 = scmp.lt.s32.totalorder %s1165, 1
          %s1167 = scalar_select %p1166, %s1165, 1
          %s1168 = smul.addr %s1167, 8
          %s1169 = scalar_lea.vmem %s4, %s1168
        $region56: #{tpu_custom_call.1} parent=43 // pred_fallthru
          _
      $region44: #{tpu_custom_call.1} parent=5 // pred_fallthru
        _
    $region6: #{tpu_custom_call.1} parent=1 // loop_footer
      %s18 = sadd.s32 1, %s14
    $region7: #{tpu_custom_call.1} parent=1 // loop_footer_branch
      %13 = sbr.rel target = $region3
    $region8: #{tpu_custom_call.1} parent=1 // loop_exit
      _
    %1170 = vsyncpa [#allocation3], 1
    %s1171 = scalar_lea.sflag [#allocation3], 1
    %1172 = vsyncpa %s1171, 1

</llo_original>
